<compile_context>
chip_gen: v6e
topology: v6e:2x2x1
jax: 0.10.0
libtpu: 0.0.40
codegen_flags: <defaults>
</compile_context>

<pallas_src>
from functools import partial

import numpy as np
import jax
import jax.numpy as jnp
from jax.experimental import pallas as pl
from jax.experimental.pallas import tpu as pltpu


# ----------------------------------------------------------------------------
# Pallas kernel: one Euler step per inner grid iteration; x carried in the
# output block (resident per (batch, T-tile) across all steps).
# ----------------------------------------------------------------------------
def cfm_euler_kernel(t_ref, dt_ref,                        # SMEM scalar tables
                     z_ref, mu_ref, mask_ref, spk_ref,     # VMEM tensors
                     wx_ref, wm_ref, ws_ref, wt_ref, b1_ref, wo_ref, b2_ref,
                     x_ref,                                # output / carried x
                     cond_h_ref,                           # VMEM scratch
                     *, inference_cfg_rate):
    step = pl.program_id(2)          # Euler step ("arbitrary", innermost)
    n_steps = pl.num_programs(2)

    # Read the per-step scalars from SMEM first (cheap scalar path).
    t = t_ref[step]
    dt = dt_ref[step]

    # ---- step 0 (per (b, tile)): init x <- z (pipelined VMEM block) and
    #      precompute the step-invariant conditioning  mu@wm + spks@ws.
    @pl.when(step == 0)
    def _init():
        x_ref[...] = z_ref[...]
        mu_h = jnp.dot(mu_ref[...], wm_ref[...],
                       preferred_element_type=jnp.float32)      # (tT, Hp)
        spk_h = jnp.dot(spk_ref[...], ws_ref[...],
                        preferred_element_type=jnp.float32)     # (1, Hp)
        cond_h_ref[...] = mu_h + spk_h

    x = x_ref[...]                                              # (tT, Cp) f32

    # Shared projection of the current state (only x-dependent matmul);
    # bf16 MXU operands, f32 accumulation.
    xwx = jnp.dot(x.astype(jnp.bfloat16), wx_ref[...],
                  preferred_element_type=jnp.float32)           # (tT, Hp)
    # Time embedding, computed once per step, shared by both CFG branches.
    tb = t * wt_ref[...] + b1_ref[...]                          # (1, Hp) f32

    # Elementwise math kept in f32 (v5e has no bf16 VPU/EUP).
    h_cond = jnp.tanh(xwx + cond_h_ref[...] + tb)
    if inference_cfg_rate > 0:
        # Unconditional branch: mu = 0, spks = 0 => conditioning term vanishes
        # (no zero-matmuls).  Fold CFG before the output projection.
        h_uncond = jnp.tanh(xwx + tb)
        h_mix = ((1.0 + inference_cfg_rate) * h_cond
                 - inference_cfg_rate * h_uncond)
    else:
        h_mix = h_cond

    out = jnp.dot(h_mix.astype(jnp.bfloat16), wo_ref[...],
                  preferred_element_type=jnp.float32)           # (tT, Cp)
    dphi_dt = out + b2_ref[...]
    x_new = x + dt * dphi_dt                                    # f32 update
    x_ref[...] = x_new

    # ---- finalize (mask hoisted out of the loop; exact for 0/1 masks).
    @pl.when(step == n_steps - 1)
    def _finalize():
        m = mask_ref[...]                                       # (tT, 1)
        x_ref[...] = m * x_new + (1.0 - m) * z_ref[...]


# ----------------------------------------------------------------------------
# Wrapper: pads lane/sublane dims, builds the grid spec, calls pallas_call.
# ----------------------------------------------------------------------------
def _round_up(x, m):
    return ((x + m - 1) // m) * m


def _pad2(a, rows, cols):
    return jnp.pad(a, ((0, rows - a.shape[0]), (0, cols - a.shape[1])))


def _pick_tile_t(T, Cp, Hp, Sp, budget_bytes=24 * 1024 * 1024):
    """Largest power-of-two tile_t (>=8) whose per-tile working set fits the
    VMEM budget (kept v7x-safe: 64 MiB/TC total)."""
    # Weights / spks: bf16, double-buffered.
    fixed = 2 * 2 * (2 * Cp * Hp + Hp * Cp + Sp * Hp) + 4 * (2 * Hp + 2 * Cp)
    per_row = (2 * 4 * Cp        # x output block (2 buffers, f32)
               + 2 * 4 * Cp      # z block       (2 buffers, f32)
               + 2 * 2 * Cp      # mu block      (2 buffers, bf16)
               + 2 * 4 * 128     # mask block    (2 buffers, lane-padded f32)
               + 4 * Hp          # cond_h scratch (f32)
               + 4 * (3 * Hp + 2 * Cp))   # in-kernel f32 temporaries
    cap = _round_up(max(T, 8), 8)
    best = 8
    for cand in (8, 16, 32, 64, 128, 256, 512, 1024, 2048):
        if cand > cap:
            break
        if cand * per_row + fixed <= budget_bytes:
            best = cand
    return best


def solve_euler_pallas(z, mu, mask, spks, params, t_vals, dt_vals,
                       inference_cfg_rate):
    """z, mu: (B, T, C); mask: (B, T, 1) binary; spks: (B, S)."""
    B, T, C = mu.shape
    S = spks.shape[1]
    H = params["wx"].shape[1]
    n_steps = int(t_vals.shape[0])

    f32, bf16 = jnp.float32, jnp.bfloat16

    Cp = _round_up(C, 128)
    Hp = _round_up(H, 128)
    Sp = _round_up(S, 128)

    tile_t = _pick_tile_t(T, Cp, Hp, Sp)
    Tp = _round_up(T, tile_t)
    n_tiles = Tp // tile_t

    # Zero-pad lane / time dims (padded channels & rows provably stay zero /
    # are sliced off at the end).
    def pad_btc(a, dtype):
        a = a.astype(f32)
        a = jnp.pad(a, ((0, 0), (0, Tp - T), (0, Cp - a.shape[-1])))
        return a.astype(dtype)

    zp = pad_btc(z, f32)
    mup = pad_btc(mu, bf16)
    maskp = jnp.pad(mask.astype(f32), ((0, 0), (0, Tp - T), (0, 0)))
    spp = jnp.pad(spks.astype(f32), ((0, 0), (0, Sp - S)))[:, None, :]
    spp = spp.astype(bf16)                                    # (B, 1, Sp)

    wx = _pad2(params["wx"], Cp, Hp).astype(bf16)
    wm = _pad2(params["wm"], Cp, Hp).astype(bf16)
    ws = _pad2(params["ws"], Sp, Hp).astype(bf16)
    wo = _pad2(params["wo"], Hp, Cp).astype(bf16)
    wt = _pad2(params["wt"], 1, Hp).astype(f32)
    b1 = _pad2(params["b1"], 1, Hp).astype(f32)
    b2 = _pad2(params["b2"], 1, Cp).astype(f32)

    grid_spec = pltpu.PrefetchScalarGridSpec(
        num_scalar_prefetch=0,
        grid=(B, n_tiles, n_steps),
        in_specs=[
            pl.BlockSpec(memory_space=pltpu.MemorySpace.SMEM),        # t table
            pl.BlockSpec(memory_space=pltpu.MemorySpace.SMEM),        # dt table
            pl.BlockSpec((None, tile_t, Cp), lambda b, i, s: (b, i, 0)),  # z
            pl.BlockSpec((None, tile_t, Cp), lambda b, i, s: (b, i, 0)),  # mu
            pl.BlockSpec((None, tile_t, 1),  lambda b, i, s: (b, i, 0)),  # mask
            pl.BlockSpec((None, 1, Sp),      lambda b, i, s: (b, 0, 0)),  # spks
            pl.BlockSpec((Cp, Hp), lambda b, i, s: (0, 0)),               # wx
            pl.BlockSpec((Cp, Hp), lambda b, i, s: (0, 0)),               # wm
            pl.BlockSpec((Sp, Hp), lambda b, i, s: (0, 0)),               # ws
            pl.BlockSpec((1, Hp),  lambda b, i, s: (0, 0)),               # wt
            pl.BlockSpec((1, Hp),  lambda b, i, s: (0, 0)),               # b1
            pl.BlockSpec((Hp, Cp), lambda b, i, s: (0, 0)),               # wo
            pl.BlockSpec((1, Cp),  lambda b, i, s: (0, 0)),               # b2
        ],
        out_specs=pl.BlockSpec((None, tile_t, Cp), lambda b, i, s: (b, i, 0)),
        scratch_shapes=[
            pltpu.VMEM((tile_t, Hp), jnp.float32),   # mu@wm + spk@ws cache
        ],
    )

    kernel = partial(cfm_euler_kernel,
                     inference_cfg_rate=float(inference_cfg_rate))

    out = pl.pallas_call(
        kernel,
        grid_spec=grid_spec,
        out_shape=jax.ShapeDtypeStruct((B, Tp, Cp), jnp.float32),
        compiler_params=pltpu.CompilerParams(
            # (batch, T-tile) axes independent -> megacore / v7x 2-TC sharding;
            # step axis carries x resident in the output block.
            dimension_semantics=("parallel", "parallel", "arbitrary"),
            vmem_limit_bytes=48 * 1024 * 1024),
    )(t_vals, dt_vals, zp, mup, maskp, spp, wx, wm, ws, wt, b1, wo, b2)

    return out[:, :T, :C]


# ----------------------------------------------------------------------------
# ConditionalCFM.forward glue (noise, t_span, cosine scheduler, Euler tables)
# ----------------------------------------------------------------------------
def conditional_cfm_forward(key, mu, mask, spks, params, n_timesteps,
                            temperature=1.0, t_scheduler="cosine",
                            inference_cfg_rate=0.7):
    z = jax.random.normal(key, mu.shape, mu.dtype) * temperature

    t_span = np.linspace(0.0, 1.0, n_timesteps + 1, dtype=np.float32)
    if t_scheduler == "cosine":
        t_span = (1.0 - np.cos(t_span * 0.5 * np.pi)).astype(np.float32)

    # Replicate the torch loop's t/dt accumulation exactly (incl. fp order).
    t = np.float32(t_span[0])
    dt = np.float32(t_span[1] - t_span[0])
    t_list, dt_list = [], []
    for step in range(1, len(t_span)):
        t_list.append(t)
        dt_list.append(dt)
        t = np.float32(t + dt)
        if step < len(t_span) - 1:
            dt = np.float32(t_span[step + 1] - t)
    t_vals = jnp.asarray(np.array(t_list, dtype=np.float32))
    dt_vals = jnp.asarray(np.array(dt_list, dtype=np.float32))

    out = solve_euler_pallas(z, mu, mask, spks, params, t_vals, dt_vals,
                             inference_cfg_rate)
    return out, z, t_vals, dt_vals


# ----------------------------------------------------------------------------
# Pure-JAX references.
#   * solve_euler_ref_f32: faithful to the original torch semantics (f32, two
#     full estimator calls per step, zeros for the CFG branch, combine after,
#     mask applied every step).
#   * solve_euler_ref_bf16: mirrors the kernel's exact math (bf16 matmul
#     operands with f32 accumulation, CFG folded before the output
#     projection, mask applied once at the end) -> tight correctness check of
#     the Pallas implementation itself.
# ----------------------------------------------------------------------------
def solve_euler_ref_f32(z, mu, mask, spks, params, t_vals, dt_vals, rate):
    x = z
    for i in range(t_vals.shape[0]):
        t = t_vals[i]
        dt = dt_vals[i]

        def est(mu_in, spk_in):
            h = x @ params["wx"] + mu_in @ params["wm"]
            h = h + (spk_in @ params["ws"])[:, None, :]
            h = h + t * params["wt"][None] + params["b1"][None]
            h = jnp.tanh(h)
            return (h @ params["wo"] + params["b2"][None]) * mask

        d = est(mu, spks)
        if rate > 0:
            dc = est(jnp.zeros_like(mu), jnp.zeros_like(spks))
            d = (1.0 + rate) * d - rate * dc
        x = x + dt * d
    return x


def solve_euler_ref_bf16(z, mu, mask, spks, params, t_vals, dt_vals, rate):
    bf16, f32 = jnp.bfloat16, jnp.float32
    wx = params["wx"].astype(bf16)
    wm = params["wm"].astype(bf16)
    ws = params["ws"].astype(bf16)
    wo = params["wo"].astype(bf16)
    wt, b1, b2 = params["wt"], params["b1"], params["b2"]

    cond_h = (jnp.einsum("btc,ch->bth", mu.astype(bf16), wm,
                         preferred_element_type=f32)
              + jnp.einsum("bs,sh->bh", spks.astype(bf16), ws,
                           preferred_element_type=f32)[:, None, :])
    x = z
    for i in range(t_vals.shape[0]):
        t = t_vals[i]
        dt = dt_vals[i]
        xwx = jnp.einsum("btc,ch->bth", x.astype(bf16), wx,
                         preferred_element_type=f32)
        tb = (t * wt + b1)[None]
        h_cond = jnp.tanh(xwx + cond_h + tb)
        if rate > 0:
            h_uncond = jnp.tanh(xwx + tb)
            h_mix = (1.0 + rate) * h_cond - rate * h_uncond
        else:
            h_mix = h_cond
        out = jnp.einsum("bth,hc->btc", h_mix.astype(bf16), wo,
                         preferred_element_type=f32)
        x = x + dt * (out + b2[None])
    return mask * x + (1.0 - mask) * z


if __name__ == "__main__":
    # small shapes: batch=2, n_feats(C)=64, mel_timesteps(T)=16,
    # hidden(H)=32, spk_emb_dim(S)=64, n_timesteps=10
    B, T, C, H, S = 2, 16, 64, 32, 64
    n_timesteps = 10
    temperature = 1.0
    inference_cfg_rate = 0.7
    t_scheduler = "cosine"
    # TODO(synk): sigma_min / compute_loss path not exercised (training-only).

    key = jax.random.PRNGKey(0)
    k = jax.random.split(key, 12)

    mu = jax.random.normal(k[0], (B, T, C), jnp.float32)
    spks = jax.random.normal(k[1], (B, S), jnp.float32)

    # mask: (B, 1, T) in PyTorch convention -> (B, T, 1) channels-last here.
    mask_bt = jnp.ones((B, T), jnp.float32).at[1, 12:].set(0.0)
    mask = mask_bt[:, :, None]

    # Deterministic synthetic estimator weights.
    params = {
        "wx": 0.10 * jax.random.normal(k[2], (C, H), jnp.float32),
        "wm": 0.10 * jax.random.normal(k[3], (C, H), jnp.float32),
        "ws": 0.05 * jax.random.normal(k[4], (S, H), jnp.float32),
        "wt": 0.50 * jax.random.normal(k[5], (1, H), jnp.float32),
        "b1": 0.01 * jax.random.normal(k[6], (1, H), jnp.float32),
        "wo": 0.10 * jax.random.normal(k[7], (H, C), jnp.float32),
        "b2": 0.01 * jax.random.normal(k[8], (1, C), jnp.float32),
    }

    out, z, t_vals, dt_vals = conditional_cfm_forward(
        k[9], mu, mask, spks, params, n_timesteps,
        temperature=temperature, t_scheduler=t_scheduler,
        inference_cfg_rate=inference_cfg_rate)
    out = jax.block_until_ready(out)

    # Tight check: kernel vs a pure-JAX mirror of its exact math (same bf16
    # matmul operands, f32 accumulation).  Verifies tiling / padding / CFG
    # fold / mask-hoist / Euler plumbing.
    mirror = solve_euler_ref_bf16(z, mu, mask, spks, params, t_vals, dt_vals,
                                  inference_cfg_rate)
    np.testing.assert_allclose(np.asarray(out), np.asarray(mirror),
                               rtol=2e-3, atol=2e-3)

    # Loose check vs the f32, torch-faithful reference: bounds the numerical
    # drift introduced by bf16 MXU operands over the 10-step Euler solve.
    ref = solve_euler_ref_f32(z, mu, mask, spks, params, t_vals, dt_vals,
                              inference_cfg_rate)
    np.testing.assert_allclose(np.asarray(out), np.asarray(ref),
                               rtol=1e-1, atol=1e-1)

    print("KERNEL_OK")
</pallas_src>

<mosaic_0001>
module attributes {stable_mosaic.version = 11 : i64} {
  func.func @cfm_euler_kernel(%arg0: i32, %arg1: i32, %arg2: i32, %arg3: memref<10xf32, #tpu.memory_space<smem>>, %arg4: memref<10xf32, #tpu.memory_space<smem>>, %arg5: memref<1x16x128xf32, #tpu.memory_space<vmem>>, %arg6: memref<1x16x128xbf16, #tpu.memory_space<vmem>>, %arg7: memref<1x16x1xf32, #tpu.memory_space<vmem>>, %arg8: memref<1x1x128xbf16, #tpu.memory_space<vmem>>, %arg9: memref<128x128xbf16, #tpu.memory_space<vmem>>, %arg10: memref<128x128xbf16, #tpu.memory_space<vmem>>, %arg11: memref<128x128xbf16, #tpu.memory_space<vmem>>, %arg12: memref<1x128xf32, #tpu.memory_space<vmem>>, %arg13: memref<1x128xf32, #tpu.memory_space<vmem>>, %arg14: memref<128x128xbf16, #tpu.memory_space<vmem>>, %arg15: memref<1x128xf32, #tpu.memory_space<vmem>>, %arg16: memref<1x16x128xf32, #tpu.memory_space<vmem>>, %arg17: memref<16x128xf32, #tpu.memory_space<vmem>>) attributes {dimension_semantics = [#tpu.dimension_semantics<parallel>, #tpu.dimension_semantics<parallel>, #tpu.dimension_semantics<arbitrary>], iteration_bounds = array<i64: 2, 1, 10>, scalar_prefetch = 0 : i64, scratch_operands = 1 : i64, tpu.core_type = #tpu.core_type<tc>, window_params = [{transform_indices = @transform_0, window_bounds = array<i64: 10>}, {transform_indices = @transform_1, window_bounds = array<i64: 10>}, {transform_indices = @transform_2, window_bounds = array<i64: 1, 16, 128>}, {transform_indices = @transform_3, window_bounds = array<i64: 1, 16, 128>}, {transform_indices = @transform_4, window_bounds = array<i64: 1, 16, 1>}, {transform_indices = @transform_5, window_bounds = array<i64: 1, 1, 128>}, {pipeline_mode = #tpu.pipeline_mode<synchronous>, transform_indices = @transform_6, window_bounds = array<i64: 128, 128>}, {pipeline_mode = #tpu.pipeline_mode<synchronous>, transform_indices = @transform_7, window_bounds = array<i64: 128, 128>}, {pipeline_mode = #tpu.pipeline_mode<synchronous>, transform_indices = @transform_8, window_bounds = array<i64: 128, 128>}, {pipeline_mode = #tpu.pipeline_mode<synchronous>, transform_indices = @transform_9, window_bounds = array<i64: 1, 128>}, {pipeline_mode = #tpu.pipeline_mode<synchronous>, transform_indices = @transform_10, window_bounds = array<i64: 1, 128>}, {pipeline_mode = #tpu.pipeline_mode<synchronous>, transform_indices = @transform_11, window_bounds = array<i64: 128, 128>}, {pipeline_mode = #tpu.pipeline_mode<synchronous>, transform_indices = @transform_12, window_bounds = array<i64: 1, 128>}, {transform_indices = @transform_13, window_bounds = array<i64: 1, 16, 128>}]} {
    %0 = arith.index_cast %arg2 : i32 to index
    %1 = memref.load %arg3[%0] : memref<10xf32, #tpu.memory_space<smem>>
    %2 = arith.index_cast %arg2 : i32 to index
    %3 = memref.load %arg4[%2] : memref<10xf32, #tpu.memory_space<smem>>
    %c0_i32 = arith.constant 0 : i32
    %4 = arith.cmpi eq, %arg2, %c0_i32 : i32
    %5 = arith.extui %4 : i1 to i32
    %c0_i32_0 = arith.constant 0 : i32
    %6 = arith.cmpi ne, %5, %c0_i32_0 : i32
    scf.if %6 {
      %c0_22 = arith.constant 0 : index
      %c0_23 = arith.constant 0 : index
      %c0_24 = arith.constant 0 : index
      %45 = vector.load %arg5[%c0_22, %c0_23, %c0_24] : memref<1x16x128xf32, #tpu.memory_space<vmem>>, vector<1x16x128xf32>
      %46 = vector.shape_cast %45 : vector<1x16x128xf32> to vector<16x128xf32>
      %c0_25 = arith.constant 0 : index
      %c0_26 = arith.constant 0 : index
      %c0_27 = arith.constant 0 : index
      %47 = vector.load %arg16[%c0_25, %c0_26, %c0_27] : memref<1x16x128xf32, #tpu.memory_space<vmem>>, vector<1x16x128xf32>
      %48 = vector.shape_cast %47 : vector<1x16x128xf32> to vector<16x128xf32>
      %49 = vector.shape_cast %46 : vector<16x128xf32> to vector<1x16x128xf32>
      tpu.vector_store %arg16[%c0_25, %c0_26, %c0_27], %49 {strides = array<i32>} : memref<1x16x128xf32, #tpu.memory_space<vmem>>, vector<1x16x128xf32>,
      %c0_28 = arith.constant 0 : index
      %c0_29 = arith.constant 0 : index
      %c0_30 = arith.constant 0 : index
      %50 = vector.load %arg6[%c0_28, %c0_29, %c0_30] : memref<1x16x128xbf16, #tpu.memory_space<vmem>>, vector<1x16x128xbf16>
      %51 = vector.shape_cast %50 : vector<1x16x128xbf16> to vector<16x128xbf16>
      %c0_31 = arith.constant 0 : index
      %c0_32 = arith.constant 0 : index
      %52 = vector.load %arg10[%c0_31, %c0_32] : memref<128x128xbf16, #tpu.memory_space<vmem>>, vector<128x128xbf16>
      %cst_33 = arith.constant dense<0.000000e+00> : vector<16x128xf32>
      %53 = tpu.matmul %51, %52, %cst_33 {dimension_numbers = #tpu.dot_dimension_numbers<[1], [0], [0], [1], [0, 0, 1, 1], [], []>} : vector<16x128xbf16>, vector<128x128xbf16>, vector<16x128xf32> -> vector<16x128xf32>
      %c0_34 = arith.constant 0 : index
      %c0_35 = arith.constant 0 : index
      %c0_36 = arith.constant 0 : index
      %54 = vector.load %arg8[%c0_34, %c0_35, %c0_36] : memref<1x1x128xbf16, #tpu.memory_space<vmem>>, vector<1x1x128xbf16>
      %55 = vector.shape_cast %54 : vector<1x1x128xbf16> to vector<1x128xbf16>
      %c0_37 = arith.constant 0 : index
      %c0_38 = arith.constant 0 : index
      %56 = vector.load %arg11[%c0_37, %c0_38] : memref<128x128xbf16, #tpu.memory_space<vmem>>, vector<128x128xbf16>
      %cst_39 = arith.constant dense<0.000000e+00> : vector<1x128xf32>
      %57 = tpu.matmul %55, %56, %cst_39 {dimension_numbers = #tpu.dot_dimension_numbers<[1], [0], [0], [1], [0, 0, 1, 1], [], []>} : vector<1x128xbf16>, vector<128x128xbf16>, vector<1x128xf32> -> vector<1x128xf32>
      %58 = vector.broadcast %57 : vector<1x128xf32> to vector<16x128xf32>
      %59 = arith.addf %53, %58 : vector<16x128xf32>
      %c0_40 = arith.constant 0 : index
      %c0_41 = arith.constant 0 : index
      %60 = vector.load %arg17[%c0_40, %c0_41] : memref<16x128xf32, #tpu.memory_space<vmem>>, vector<16x128xf32>
      tpu.vector_store %arg17[%c0_40, %c0_41], %59 {strides = array<i32>} : memref<16x128xf32, #tpu.memory_space<vmem>>, vector<16x128xf32>,
    } else {
    }
    %c0 = arith.constant 0 : index
    %c0_1 = arith.constant 0 : index
    %c0_2 = arith.constant 0 : index
    %7 = vector.load %arg16[%c0, %c0_1, %c0_2] : memref<1x16x128xf32, #tpu.memory_space<vmem>>, vector<1x16x128xf32>
    %8 = vector.shape_cast %7 : vector<1x16x128xf32> to vector<16x128xf32>
    %9 = arith.truncf %8 : vector<16x128xf32> to vector<16x128xbf16>
    %c0_3 = arith.constant 0 : index
    %c0_4 = arith.constant 0 : index
    %10 = vector.load %arg9[%c0_3, %c0_4] : memref<128x128xbf16, #tpu.memory_space<vmem>>, vector<128x128xbf16>
    %cst = arith.constant dense<0.000000e+00> : vector<16x128xf32>
    %11 = tpu.matmul %9, %10, %cst {dimension_numbers = #tpu.dot_dimension_numbers<[1], [0], [0], [1], [0, 0, 1, 1], [], []>} : vector<16x128xbf16>, vector<128x128xbf16>, vector<16x128xf32> -> vector<16x128xf32>
    %c0_5 = arith.constant 0 : index
    %c0_6 = arith.constant 0 : index
    %12 = vector.load %arg12[%c0_5, %c0_6] : memref<1x128xf32, #tpu.memory_space<vmem>>, vector<1x128xf32>
    %13 = vector.broadcast %1 : f32 to vector<1x128xf32>
    %14 = arith.mulf %13, %12 : vector<1x128xf32>
    %c0_7 = arith.constant 0 : index
    %c0_8 = arith.constant 0 : index
    %15 = vector.load %arg13[%c0_7, %c0_8] : memref<1x128xf32, #tpu.memory_space<vmem>>, vector<1x128xf32>
    %16 = arith.addf %14, %15 : vector<1x128xf32>
    %c0_9 = arith.constant 0 : index
    %c0_10 = arith.constant 0 : index
    %17 = vector.load %arg17[%c0_9, %c0_10] : memref<16x128xf32, #tpu.memory_space<vmem>>, vector<16x128xf32>
    %18 = arith.addf %11, %17 : vector<16x128xf32>
    %19 = vector.broadcast %16 : vector<1x128xf32> to vector<16x128xf32>
    %20 = arith.addf %18, %19 : vector<16x128xf32>
    %21 = math.tanh %20 : vector<16x128xf32>
    %22 = vector.broadcast %16 : vector<1x128xf32> to vector<16x128xf32>
    %23 = arith.addf %11, %22 : vector<16x128xf32>
    %24 = math.tanh %23 : vector<16x128xf32>
    %cst_11 = arith.constant 1.700000e+00 : f32
    %25 = vector.broadcast %cst_11 : f32 to vector<16x128xf32>
    %26 = arith.mulf %25, %21 : vector<16x128xf32>
    %cst_12 = arith.constant 0.699999988 : f32
    %27 = vector.broadcast %cst_12 : f32 to vector<16x128xf32>
    %28 = arith.mulf %27, %24 : vector<16x128xf32>
    %29 = arith.subf %26, %28 : vector<16x128xf32>
    %30 = arith.truncf %29 : vector<16x128xf32> to vector<16x128xbf16>
    %c0_13 = arith.constant 0 : index
    %c0_14 = arith.constant 0 : index
    %31 = vector.load %arg14[%c0_13, %c0_14] : memref<128x128xbf16, #tpu.memory_space<vmem>>, vector<128x128xbf16>
    %cst_15 = arith.constant dense<0.000000e+00> : vector<16x128xf32>
    %32 = tpu.matmul %30, %31, %cst_15 {dimension_numbers = #tpu.dot_dimension_numbers<[1], [0], [0], [1], [0, 0, 1, 1], [], []>} : vector<16x128xbf16>, vector<128x128xbf16>, vector<16x128xf32> -> vector<16x128xf32>
    %c0_16 = arith.constant 0 : index
    %c0_17 = arith.constant 0 : index
    %33 = vector.load %arg15[%c0_16, %c0_17] : memref<1x128xf32, #tpu.memory_space<vmem>>, vector<1x128xf32>
    %34 = vector.broadcast %33 : vector<1x128xf32> to vector<16x128xf32>
    %35 = arith.addf %32, %34 : vector<16x128xf32>
    %36 = vector.broadcast %3 : f32 to vector<16x128xf32>
    %37 = arith.mulf %36, %35 : vector<16x128xf32>
    %38 = arith.addf %8, %37 : vector<16x128xf32>
    %c0_18 = arith.constant 0 : index
    %c0_19 = arith.constant 0 : index
    %c0_20 = arith.constant 0 : index
    %39 = vector.load %arg16[%c0_18, %c0_19, %c0_20] : memref<1x16x128xf32, #tpu.memory_space<vmem>>, vector<1x16x128xf32>
    %40 = vector.shape_cast %39 : vector<1x16x128xf32> to vector<16x128xf32>
    %41 = vector.shape_cast %38 : vector<16x128xf32> to vector<1x16x128xf32>
    tpu.vector_store %arg16[%c0_18, %c0_19, %c0_20], %41 {strides = array<i32>} : memref<1x16x128xf32, #tpu.memory_space<vmem>>, vector<1x16x128xf32>,
    %c9_i32 = arith.constant 9 : i32
    %42 = arith.cmpi eq, %arg2, %c9_i32 : i32
    %43 = arith.extui %42 : i1 to i32
    %c0_i32_21 = arith.constant 0 : i32
    %44 = arith.cmpi ne, %43, %c0_i32_21 : i32
    scf.if %44 {
      %c0_22 = arith.constant 0 : index
      %c0_23 = arith.constant 0 : index
      %c0_24 = arith.constant 0 : index
      %45 = vector.load %arg7[%c0_22, %c0_23, %c0_24] : memref<1x16x1xf32, #tpu.memory_space<vmem>>, vector<1x16x1xf32>
      %46 = vector.shape_cast %45 : vector<1x16x1xf32> to vector<16x1xf32>
      %47 = vector.broadcast %46 : vector<16x1xf32> to vector<16x128xf32>
      %48 = arith.mulf %47, %38 : vector<16x128xf32>
      %cst_25 = arith.constant 1.000000e+00 : f32
      %49 = vector.broadcast %cst_25 : f32 to vector<16x1xf32>
      %50 = arith.subf %49, %46 : vector<16x1xf32>
      %c0_26 = arith.constant 0 : index
      %c0_27 = arith.constant 0 : index
      %c0_28 = arith.constant 0 : index
      %51 = vector.load %arg5[%c0_26, %c0_27, %c0_28] : memref<1x16x128xf32, #tpu.memory_space<vmem>>, vector<1x16x128xf32>
      %52 = vector.shape_cast %51 : vector<1x16x128xf32> to vector<16x128xf32>
      %53 = vector.broadcast %50 : vector<16x1xf32> to vector<16x128xf32>
      %54 = arith.mulf %53, %52 : vector<16x128xf32>
      %55 = arith.addf %48, %54 : vector<16x128xf32>
      %c0_29 = arith.constant 0 : index
      %c0_30 = arith.constant 0 : index
      %c0_31 = arith.constant 0 : index
      %56 = vector.load %arg16[%c0_29, %c0_30, %c0_31] : memref<1x16x128xf32, #tpu.memory_space<vmem>>, vector<1x16x128xf32>
      %57 = vector.shape_cast %56 : vector<1x16x128xf32> to vector<16x128xf32>
      %58 = vector.shape_cast %55 : vector<16x128xf32> to vector<1x16x128xf32>
      tpu.vector_store %arg16[%c0_29, %c0_30, %c0_31], %58 {strides = array<i32>} : memref<1x16x128xf32, #tpu.memory_space<vmem>>, vector<1x16x128xf32>,
    } else {
    }
    return
  }
  func.func @transform_0(%arg0: i32, %arg1: i32, %arg2: i32) -> i32 {
    %c0_i32 = arith.constant 0 : i32
    %c0_i32_0 = arith.constant 0 : i32
    return %c0_i32 : i32
  }
  func.func @transform_1(%arg0: i32, %arg1: i32, %arg2: i32) -> i32 {
    %c0_i32 = arith.constant 0 : i32
    %c0_i32_0 = arith.constant 0 : i32
    return %c0_i32 : i32
  }
  func.func @transform_2(%arg0: i32, %arg1: i32, %arg2: i32) -> (i32, i32, i32) {
    %c0_i32 = arith.constant 0 : i32
    %c0_i32_0 = arith.constant 0 : i32
    return %arg0, %arg1, %c0_i32 : i32, i32, i32
  }
  func.func @transform_3(%arg0: i32, %arg1: i32, %arg2: i32) -> (i32, i32, i32) {
    %c0_i32 = arith.constant 0 : i32
    %c0_i32_0 = arith.constant 0 : i32
    return %arg0, %arg1, %c0_i32 : i32, i32, i32
  }
  func.func @transform_4(%arg0: i32, %arg1: i32, %arg2: i32) -> (i32, i32, i32) {
    %c0_i32 = arith.constant 0 : i32
    %c0_i32_0 = arith.constant 0 : i32
    return %arg0, %arg1, %c0_i32 : i32, i32, i32
  }
  func.func @transform_5(%arg0: i32, %arg1: i32, %arg2: i32) -> (i32, i32, i32) {
    %c0_i32 = arith.constant 0 : i32
    %c0_i32_0 = arith.constant 0 : i32
    %c0_i32_1 = arith.constant 0 : i32
    return %arg0, %c0_i32, %c0_i32_0 : i32, i32, i32
  }
  func.func @transform_6(%arg0: i32, %arg1: i32, %arg2: i32) -> (i32, i32) {
    %c0_i32 = arith.constant 0 : i32
    %c0_i32_0 = arith.constant 0 : i32
    %c0_i32_1 = arith.constant 0 : i32
    return %c0_i32, %c0_i32_0 : i32, i32
  }
  func.func @transform_7(%arg0: i32, %arg1: i32, %arg2: i32) -> (i32, i32) {
    %c0_i32 = arith.constant 0 : i32
    %c0_i32_0 = arith.constant 0 : i32
    %c0_i32_1 = arith.constant 0 : i32
    return %c0_i32, %c0_i32_0 : i32, i32
  }
  func.func @transform_8(%arg0: i32, %arg1: i32, %arg2: i32) -> (i32, i32) {
    %c0_i32 = arith.constant 0 : i32
    %c0_i32_0 = arith.constant 0 : i32
    %c0_i32_1 = arith.constant 0 : i32
    return %c0_i32, %c0_i32_0 : i32, i32
  }
  func.func @transform_9(%arg0: i32, %arg1: i32, %arg2: i32) -> (i32, i32) {
    %c0_i32 = arith.constant 0 : i32
    %c0_i32_0 = arith.constant 0 : i32
    %c0_i32_1 = arith.constant 0 : i32
    return %c0_i32, %c0_i32_0 : i32, i32
  }
  func.func @transform_10(%arg0: i32, %arg1: i32, %arg2: i32) -> (i32, i32) {
    %c0_i32 = arith.constant 0 : i32
    %c0_i32_0 = arith.constant 0 : i32
    %c0_i32_1 = arith.constant 0 : i32
    return %c0_i32, %c0_i32_0 : i32, i32
  }
  func.func @transform_11(%arg0: i32, %arg1: i32, %arg2: i32) -> (i32, i32) {
    %c0_i32 = arith.constant 0 : i32
    %c0_i32_0 = arith.constant 0 : i32
    %c0_i32_1 = arith.constant 0 : i32
    return %c0_i32, %c0_i32_0 : i32, i32
  }
  func.func @transform_12(%arg0: i32, %arg1: i32, %arg2: i32) -> (i32, i32) {
    %c0_i32 = arith.constant 0 : i32
    %c0_i32_0 = arith.constant 0 : i32
    %c0_i32_1 = arith.constant 0 : i32
    return %c0_i32, %c0_i32_0 : i32, i32
  }
  func.func @transform_13(%arg0: i32, %arg1: i32, %arg2: i32) -> (i32, i32, i32) {
    %c0_i32 = arith.constant 0 : i32
    %c0_i32_0 = arith.constant 0 : i32
    return %arg0, %arg1, %c0_i32 : i32, i32, i32
  }
}

</mosaic_0001>

<llo_original>
// kernel: tpu_custom_call.1
$region0: #{tpu_custom_call.1}
  #allocation0 [shape = 'u32[]', space=smem, size = 0x4, offset = 0x4, fixed_abs, tag = 'smem constant byte address 0x4 - core index']
  #allocation1 [shape = 'u32[144,128]{1,0:T(1,128)}', space=vmem, size = 0x12000, scoped, tag = 'internal scratch']
  #allocation2 [shape = 'f32[16,128]{1,0:T(8,128)}', space=vmem, size = 0x2000, scoped, tag = 'scratch operand']
  %s0 = inlined_call_operand.vmem [shape: f32[10], index: 0, kind: input, shape index: {}]
  %s1 = inlined_call_operand.vmem [shape: f32[10], index: 1, kind: input, shape index: {}]
  %s2 = inlined_call_operand.vmem [shape: f32[2,16,128], index: 2, kind: input, shape index: {}]
  %s3 = inlined_call_operand.hbm [shape: bf16[2,16,128], index: 3, kind: input, shape index: {}]
  %s4 = inlined_call_operand.vmem [shape: f32[2,16,1], index: 4, kind: input, shape index: {}]
  %s5 = inlined_call_operand.vmem [shape: bf16[2,1,128], index: 5, kind: input, shape index: {}]
  %s6 = inlined_call_operand.hbm [shape: bf16[128,128], index: 6, kind: input, shape index: {}]
  %s7 = inlined_call_operand.hbm [shape: bf16[128,128], index: 7, kind: input, shape index: {}]
  %s8 = inlined_call_operand.hbm [shape: bf16[128,128], index: 8, kind: input, shape index: {}]
  %s9 = inlined_call_operand.vmem [shape: f32[1,128], index: 9, kind: input, shape index: {}]
  %s10 = inlined_call_operand.vmem [shape: f32[1,128], index: 10, kind: input, shape index: {}]
  %s11 = inlined_call_operand.hbm [shape: bf16[128,128], index: 11, kind: input, shape index: {}]
  %s12 = inlined_call_operand.vmem [shape: f32[1,128], index: 12, kind: input, shape index: {}]
  %s13 = inlined_call_operand.hbm [shape: f32[2,16,128], index: 13, kind: output, shape index: {}]
  %s14 = sld [smem:[#allocation0]]
  $region121: #{tpu_custom_call.1} parent=0
    _
  %s16 = ssub.s32 1, %s14
  %s17 = scalar_select 0, %s16, %s14
  $region1: #{tpu_custom_call.1} parent=0
    #allocation3 [shape = 'u8[512]{0}', space=smem, size = 0x200, scoped, tag = 'input window, operand 0, single buffered']
    #allocation4 [shape = 's32[2]{0}', space=sflag, size = 0x8, scoped, tag = 'scoped memory for tpu_custom_call.1']
    #allocation5 [shape = 's32[2]{0}', space=sflag, size = 0x8, scoped, tag = 'scoped memory for tpu_custom_call.1']
    #allocation6 [shape = 's32[2]{0}', space=sflag, size = 0x8, scoped, tag = 'scoped memory for tpu_custom_call.1']
    #allocation7 [shape = 'u8[512]{0}', space=smem, size = 0x200, scoped, tag = 'input window, operand 1, single buffered']
    #allocation8 [shape = 's32[1]{0}', space=sflag, size = 0x4, scoped, tag = 'scoped memory for tpu_custom_call.1']
    #allocation9 [shape = 'u8[8192]{0}', space=vmem, size = 0x2000, scoped, tag = 'input window, operand 3']
    #allocation10 [shape = 'u8[32768]{0}', space=vmem, size = 0x8000, scoped, tag = 'input window, operand 6, single buffered']
    #allocation11 [shape = 's32[1]{0}', space=sflag, size = 0x4, scoped, tag = 'scoped memory for tpu_custom_call.1']
    #allocation12 [shape = 'u8[32768]{0}', space=vmem, size = 0x8000, scoped, tag = 'input window, operand 7, single buffered']
    #allocation13 [shape = 'u8[32768]{0}', space=vmem, size = 0x8000, scoped, tag = 'input window, operand 8, single buffered']
    #allocation14 [shape = 's32[1]{0}', space=sflag, size = 0x4, scoped, tag = 'scoped memory for tpu_custom_call.1']
    #allocation15 [shape = 'u8[32768]{0}', space=vmem, size = 0x8000, scoped, tag = 'input window, operand 11, single buffered']
    #allocation16 [shape = 'u8[16384]{0}', space=vmem, size = 0x4000, scoped, tag = 'output window, operand 0']
    %18 = vsyncpa [#allocation6], 0
    %19 = vsyncpa [#allocation8], 0
    %20 = vsyncpa [#allocation4], 0
    %s21 = scalar_lea.sflag [#allocation4], 1
    %22 = vsyncpa %s21, 0
    %23 = vsyncpa [#allocation11], 0
    %24 = vsyncpa [#allocation14], 0
    %25 = vsyncpa [#allocation5], 0
    %s26 = scalar_lea.sflag [#allocation5], 1
    %27 = vsyncpa %s26, 0
    loop: start=0, step=1, limit=22
    $region2: #{tpu_custom_call.1} parent=1 // loop_pre_header
      _
    $region3: #{tpu_custom_call.1} parent=1 // loop_header
      %s29 = sphi 0, %s33
      %p30 = scmp.ge.s32.totalorder %s29, 22
      %s36 = sphi 0, %s55
      %s37 = sphi 0, %s51
      %s38 = sphi 0, %s47
      %s39 = sphi 0, %s36
      %s40 = sphi 0, %s37
      %s41 = sphi 0, %s38
      %s42 = sphi 0, %s39
      %s43 = sphi 0, %s40
      %s44 = sphi 0, %s41
      %s56 = sphi 0, %s56
      %s58 = sphi 0, %s56
      %s59 = sphi 0, %s58
      %s73 = sphi 0, %s59
      %s77 = sphi 0, %s77
      %s79 = sphi 0, %s77
      %s80 = sphi 0, %s79
      %s94 = sphi 0, %s80
      %s102 = sphi 0, %s104
      %s105 = sphi 0, %s102
      %s106 = sphi 0, %s105
      %s122 = sphi 0, %s106
      %s130 = sphi 0, %s132
      %s133 = sphi 0, %s130
      %s134 = sphi 0, %s133
      %s150 = sphi 0, %s134
      %s158 = sphi 0, %s160
      %s161 = sphi 0, %s158
      %s162 = sphi 0, %s161
      %s178 = sphi 0, %s162
      %s184 = sphi 0, %s186
      %s187 = sphi 0, %s184
      %s188 = sphi 0, %s187
      %s204 = sphi 0, %s188
      %s208 = sphi 0, %s208
      %s210 = sphi 0, %s208
      %s211 = sphi 0, %s210
      %s225 = sphi 0, %s211
      %s229 = sphi 0, %s229
      %s231 = sphi 0, %s229
      %s232 = sphi 0, %s231
      %s246 = sphi 0, %s232
      %s250 = sphi 0, %s250
      %s252 = sphi 0, %s250
      %s253 = sphi 0, %s252
      %s267 = sphi 0, %s253
      %s271 = sphi 0, %s271
      %s273 = sphi 0, %s271
      %s274 = sphi 0, %s273
      %s288 = sphi 0, %s274
      %s292 = sphi 0, %s292
      %s294 = sphi 0, %s292
      %s295 = sphi 0, %s294
      %s309 = sphi 0, %s295
      %s313 = sphi 0, %s313
      %s315 = sphi 0, %s313
      %s316 = sphi 0, %s315
      %s330 = sphi 0, %s316
      %s334 = sphi 0, %s334
      %s336 = sphi 0, %s334
      %s337 = sphi 0, %s336
      %s351 = sphi 0, %s337
      %s359 = sphi 0, %s361
      %s362 = sphi 0, %s359
      %s363 = sphi 0, %s362
      %s379 = sphi 0, %s363
    $region4: #{tpu_custom_call.1} parent=1 // loop_header_branch
      %32 = sbr.rel (%p30) target = $region8
    $region5: #{tpu_custom_call.1} parent=1 // loop_body
      %s34 = ssub.s32 %s29, 1
      %s35 = ssub.s32 %s29, 2
      %s45 = sadd.s32 1, %s38
      %p46 = scmp.ge.s32.totalorder %s45, 10
      %s47 = scalar_select %p46, 0, %s45
      %s48 = sadd.s32 1, %s37
      %s49 = scalar_select %p46, %s48, %s37
      %p50 = scmp.ge.s32.totalorder %s49, 1
      %s51 = scalar_select %p50, 0, %s49
      %s52 = sadd.s32 1, %s36
      %s53 = scalar_select %p50, %s52, %s36
      %p54 = scmp.ge.s32.totalorder %s53, 2
      %s55 = scalar_select %p54, 0, %s53
      %s57 = sadd.s32 %s56, 1
      %p60 = scmp.eq.s32.totalorder %s29, 19
      %p61 = scmp.ne.s32.totalorder %s56, %s58
      %p62 = scmp.eq.s32.totalorder %s29, 0
      %p63 = por %p61, %p62
      %p64 = scmp.ne.s32.totalorder %s56, %s58
      %p65 = scmp.eq.s32.totalorder %s34, 19
      %p66 = por %p64, %p65
      %p67 = scmp.ne.s32.totalorder %s58, %s59
      %p68 = scmp.eq.s32.totalorder %s34, 0
      %p69 = por %p67, %p68
      %p70 = scmp.ne.s32.totalorder %s58, %s59
      %p71 = scmp.eq.s32.totalorder %s35, 19
      %p72 = por %p70, %p71
      %p74 = scmp.ne.s32.totalorder %s59, %s73
      %p75 = scmp.eq.s32.totalorder %s35, 0
      %p76 = por %p74, %p75
      %s78 = sadd.s32 %s77, 1
      %p81 = scmp.eq.s32.totalorder %s29, 19
      %p82 = scmp.ne.s32.totalorder %s77, %s79
      %p83 = scmp.eq.s32.totalorder %s29, 0
      %p84 = por %p82, %p83
      %p85 = scmp.ne.s32.totalorder %s77, %s79
      %p86 = scmp.eq.s32.totalorder %s34, 19
      %p87 = por %p85, %p86
      %p88 = scmp.ne.s32.totalorder %s79, %s80
      %p89 = scmp.eq.s32.totalorder %s34, 0
      %p90 = por %p88, %p89
      %p91 = scmp.ne.s32.totalorder %s79, %s80
      %p92 = scmp.eq.s32.totalorder %s35, 19
      %p93 = por %p91, %p92
      %p95 = scmp.ne.s32.totalorder %s80, %s94
      %p96 = scmp.eq.s32.totalorder %s35, 0
      %p97 = por %p95, %p96
      %s98 = ssub.s32 %s36, %s55
      %s99 = ssub.s32 %s37, %s51
      %s100 = sor.u32 %s98, %s99
      %p101 = scmp.eq.s32.totalorder %s100, 0
      %s103 = sadd.s32 %s102, 1
      %s104 = scalar_select %p101, %s102, %s103
      %p107 = pneg %p101
      %p108 = scmp.eq.s32.totalorder %s29, 19
      %p109 = por %p107, %p108
      %p110 = scmp.ne.s32.totalorder %s102, %s105
      %p111 = scmp.eq.s32.totalorder %s29, 0
      %p112 = por %p110, %p111
      %p113 = scmp.ne.s32.totalorder %s102, %s105
      %p114 = scmp.eq.s32.totalorder %s34, 19
      %p115 = por %p113, %p114
      %p116 = scmp.ne.s32.totalorder %s105, %s106
      %p117 = scmp.eq.s32.totalorder %s34, 0
      %p118 = por %p116, %p117
      %p119 = scmp.ne.s32.totalorder %s105, %s106
      %p120 = scmp.eq.s32.totalorder %s35, 19
      %p121 = por %p119, %p120
      %p123 = scmp.ne.s32.totalorder %s106, %s122
      %p124 = scmp.eq.s32.totalorder %s35, 0
      %p125 = por %p123, %p124
      %s126 = ssub.s32 %s36, %s55
      %s127 = ssub.s32 %s37, %s51
      %s128 = sor.u32 %s126, %s127
      %p129 = scmp.eq.s32.totalorder %s128, 0
      %s131 = sadd.s32 %s130, 1
      %s132 = scalar_select %p129, %s130, %s131
      %p135 = pneg %p129
      %p136 = scmp.eq.s32.totalorder %s29, 19
      %p137 = por %p135, %p136
      %p138 = scmp.ne.s32.totalorder %s130, %s133
      %p139 = scmp.eq.s32.totalorder %s29, 0
      %p140 = por %p138, %p139
      %p141 = scmp.ne.s32.totalorder %s130, %s133
      %p142 = scmp.eq.s32.totalorder %s34, 19
      %p143 = por %p141, %p142
      %p144 = scmp.ne.s32.totalorder %s133, %s134
      %p145 = scmp.eq.s32.totalorder %s34, 0
      %p146 = por %p144, %p145
      %p147 = scmp.ne.s32.totalorder %s133, %s134
      %p148 = scmp.eq.s32.totalorder %s35, 19
      %p149 = por %p147, %p148
      %p151 = scmp.ne.s32.totalorder %s134, %s150
      %p152 = scmp.eq.s32.totalorder %s35, 0
      %p153 = por %p151, %p152
      %s154 = ssub.s32 %s36, %s55
      %s155 = ssub.s32 %s37, %s51
      %s156 = sor.u32 %s154, %s155
      %p157 = scmp.eq.s32.totalorder %s156, 0
      %s159 = sadd.s32 %s158, 1
      %s160 = scalar_select %p157, %s158, %s159
      %p163 = pneg %p157
      %p164 = scmp.eq.s32.totalorder %s29, 19
      %p165 = por %p163, %p164
      %p166 = scmp.ne.s32.totalorder %s158, %s161
      %p167 = scmp.eq.s32.totalorder %s29, 0
      %p168 = por %p166, %p167
      %p169 = scmp.ne.s32.totalorder %s158, %s161
      %p170 = scmp.eq.s32.totalorder %s34, 19
      %p171 = por %p169, %p170
      %p172 = scmp.ne.s32.totalorder %s161, %s162
      %p173 = scmp.eq.s32.totalorder %s34, 0
      %p174 = por %p172, %p173
      %p175 = scmp.ne.s32.totalorder %s161, %s162
      %p176 = scmp.eq.s32.totalorder %s35, 19
      %p177 = por %p175, %p176
      %p179 = scmp.ne.s32.totalorder %s162, %s178
      %p180 = scmp.eq.s32.totalorder %s35, 0
      %p181 = por %p179, %p180
      %s182 = ssub.s32 %s36, %s55
      %p183 = scmp.eq.s32.totalorder %s182, 0
      %s185 = sadd.s32 %s184, 1
      %s186 = scalar_select %p183, %s184, %s185
      %p189 = pneg %p183
      %p190 = scmp.eq.s32.totalorder %s29, 19
      %p191 = por %p189, %p190
      %p192 = scmp.ne.s32.totalorder %s184, %s187
      %p193 = scmp.eq.s32.totalorder %s29, 0
      %p194 = por %p192, %p193
      %p195 = scmp.ne.s32.totalorder %s184, %s187
      %p196 = scmp.eq.s32.totalorder %s34, 19
      %p197 = por %p195, %p196
      %p198 = scmp.ne.s32.totalorder %s187, %s188
      %p199 = scmp.eq.s32.totalorder %s34, 0
      %p200 = por %p198, %p199
      %p201 = scmp.ne.s32.totalorder %s187, %s188
      %p202 = scmp.eq.s32.totalorder %s35, 19
      %p203 = por %p201, %p202
      %p205 = scmp.ne.s32.totalorder %s188, %s204
      %p206 = scmp.eq.s32.totalorder %s35, 0
      %p207 = por %p205, %p206
      %s209 = sadd.s32 %s208, 1
      %p212 = scmp.eq.s32.totalorder %s29, 19
      %p213 = scmp.ne.s32.totalorder %s208, %s210
      %p214 = scmp.eq.s32.totalorder %s29, 0
      %p215 = por %p213, %p214
      %p216 = scmp.ne.s32.totalorder %s208, %s210
      %p217 = scmp.eq.s32.totalorder %s34, 19
      %p218 = por %p216, %p217
      %p219 = scmp.ne.s32.totalorder %s210, %s211
      %p220 = scmp.eq.s32.totalorder %s34, 0
      %p221 = por %p219, %p220
      %p222 = scmp.ne.s32.totalorder %s210, %s211
      %p223 = scmp.eq.s32.totalorder %s35, 19
      %p224 = por %p222, %p223
      %p226 = scmp.ne.s32.totalorder %s211, %s225
      %p227 = scmp.eq.s32.totalorder %s35, 0
      %p228 = por %p226, %p227
      %s230 = sadd.s32 %s229, 1
      %p233 = scmp.eq.s32.totalorder %s29, 19
      %p234 = scmp.ne.s32.totalorder %s229, %s231
      %p235 = scmp.eq.s32.totalorder %s29, 0
      %p236 = por %p234, %p235
      %p237 = scmp.ne.s32.totalorder %s229, %s231
      %p238 = scmp.eq.s32.totalorder %s34, 19
      %p239 = por %p237, %p238
      %p240 = scmp.ne.s32.totalorder %s231, %s232
      %p241 = scmp.eq.s32.totalorder %s34, 0
      %p242 = por %p240, %p241
      %p243 = scmp.ne.s32.totalorder %s231, %s232
      %p244 = scmp.eq.s32.totalorder %s35, 19
      %p245 = por %p243, %p244
      %p247 = scmp.ne.s32.totalorder %s232, %s246
      %p248 = scmp.eq.s32.totalorder %s35, 0
      %p249 = por %p247, %p248
      %s251 = sadd.s32 %s250, 1
      %p254 = scmp.eq.s32.totalorder %s29, 19
      %p255 = scmp.ne.s32.totalorder %s250, %s252
      %p256 = scmp.eq.s32.totalorder %s29, 0
      %p257 = por %p255, %p256
      %p258 = scmp.ne.s32.totalorder %s250, %s252
      %p259 = scmp.eq.s32.totalorder %s34, 19
      %p260 = por %p258, %p259
      %p261 = scmp.ne.s32.totalorder %s252, %s253
      %p262 = scmp.eq.s32.totalorder %s34, 0
      %p263 = por %p261, %p262
      %p264 = scmp.ne.s32.totalorder %s252, %s253
      %p265 = scmp.eq.s32.totalorder %s35, 19
      %p266 = por %p264, %p265
      %p268 = scmp.ne.s32.totalorder %s253, %s267
      %p269 = scmp.eq.s32.totalorder %s35, 0
      %p270 = por %p268, %p269
      %s272 = sadd.s32 %s271, 1
      %p275 = scmp.eq.s32.totalorder %s29, 19
      %p276 = scmp.ne.s32.totalorder %s271, %s273
      %p277 = scmp.eq.s32.totalorder %s29, 0
      %p278 = por %p276, %p277
      %p279 = scmp.ne.s32.totalorder %s271, %s273
      %p280 = scmp.eq.s32.totalorder %s34, 19
      %p281 = por %p279, %p280
      %p282 = scmp.ne.s32.totalorder %s273, %s274
      %p283 = scmp.eq.s32.totalorder %s34, 0
      %p284 = por %p282, %p283
      %p285 = scmp.ne.s32.totalorder %s273, %s274
      %p286 = scmp.eq.s32.totalorder %s35, 19
      %p287 = por %p285, %p286
      %p289 = scmp.ne.s32.totalorder %s274, %s288
      %p290 = scmp.eq.s32.totalorder %s35, 0
      %p291 = por %p289, %p290
      %s293 = sadd.s32 %s292, 1
      %p296 = scmp.eq.s32.totalorder %s29, 19
      %p297 = scmp.ne.s32.totalorder %s292, %s294
      %p298 = scmp.eq.s32.totalorder %s29, 0
      %p299 = por %p297, %p298
      %p300 = scmp.ne.s32.totalorder %s292, %s294
      %p301 = scmp.eq.s32.totalorder %s34, 19
      %p302 = por %p300, %p301
      %p303 = scmp.ne.s32.totalorder %s294, %s295
      %p304 = scmp.eq.s32.totalorder %s34, 0
      %p305 = por %p303, %p304
      %p306 = scmp.ne.s32.totalorder %s294, %s295
      %p307 = scmp.eq.s32.totalorder %s35, 19
      %p308 = por %p306, %p307
      %p310 = scmp.ne.s32.totalorder %s295, %s309
      %p311 = scmp.eq.s32.totalorder %s35, 0
      %p312 = por %p310, %p311
      %s314 = sadd.s32 %s313, 1
      %p317 = scmp.eq.s32.totalorder %s29, 19
      %p318 = scmp.ne.s32.totalorder %s313, %s315
      %p319 = scmp.eq.s32.totalorder %s29, 0
      %p320 = por %p318, %p319
      %p321 = scmp.ne.s32.totalorder %s313, %s315
      %p322 = scmp.eq.s32.totalorder %s34, 19
      %p323 = por %p321, %p322
      %p324 = scmp.ne.s32.totalorder %s315, %s316
      %p325 = scmp.eq.s32.totalorder %s34, 0
      %p326 = por %p324, %p325
      %p327 = scmp.ne.s32.totalorder %s315, %s316
      %p328 = scmp.eq.s32.totalorder %s35, 19
      %p329 = por %p327, %p328
      %p331 = scmp.ne.s32.totalorder %s316, %s330
      %p332 = scmp.eq.s32.totalorder %s35, 0
      %p333 = por %p331, %p332
      %s335 = sadd.s32 %s334, 1
      %p338 = scmp.eq.s32.totalorder %s29, 19
      %p339 = scmp.ne.s32.totalorder %s334, %s336
      %p340 = scmp.eq.s32.totalorder %s29, 0
      %p341 = por %p339, %p340
      %p342 = scmp.ne.s32.totalorder %s334, %s336
      %p343 = scmp.eq.s32.totalorder %s34, 19
      %p344 = por %p342, %p343
      %p345 = scmp.ne.s32.totalorder %s336, %s337
      %p346 = scmp.eq.s32.totalorder %s34, 0
      %p347 = por %p345, %p346
      %p348 = scmp.ne.s32.totalorder %s336, %s337
      %p349 = scmp.eq.s32.totalorder %s35, 19
      %p350 = por %p348, %p349
      %p352 = scmp.ne.s32.totalorder %s337, %s351
      %p353 = scmp.eq.s32.totalorder %s35, 0
      %p354 = por %p352, %p353
      %s355 = ssub.s32 %s36, %s55
      %s356 = ssub.s32 %s37, %s51
      %s357 = sor.u32 %s355, %s356
      %p358 = scmp.eq.s32.totalorder %s357, 0
      %s360 = sadd.s32 %s359, 1
      %s361 = scalar_select %p358, %s359, %s360
      %p364 = pneg %p358
      %p365 = scmp.eq.s32.totalorder %s29, 19
      %p366 = por %p364, %p365
      %p367 = scmp.ne.s32.totalorder %s359, %s362
      %p368 = scmp.eq.s32.totalorder %s29, 0
      %p369 = por %p367, %p368
      %p370 = scmp.ne.s32.totalorder %s359, %s362
      %p371 = scmp.eq.s32.totalorder %s34, 19
      %p372 = por %p370, %p371
      %p373 = scmp.ne.s32.totalorder %s362, %s363
      %p374 = scmp.eq.s32.totalorder %s34, 0
      %p375 = por %p373, %p374
      %p376 = scmp.ne.s32.totalorder %s362, %s363
      %p377 = scmp.eq.s32.totalorder %s35, 19
      %p378 = por %p376, %p377
      %p380 = scmp.ne.s32.totalorder %s363, %s379
      %p381 = scmp.eq.s32.totalorder %s35, 0
      %p382 = por %p380, %p381
      %p383 = scmp.le.s32.totalorder 1, %s29
      %p384 = scmp.lt.s32.totalorder %s29, 21
      %p385 = pnand %p383, %p384
      %p386 = pneg %p385
      // Predicated region
      $region9: #{tpu_custom_call.1} parent=5 // pred_check
        _
      $region10: #{tpu_custom_call.1} parent=5 // pred_check_branch
        %388 = sbr.rel (%p385) target = $region12
      $region11: #{tpu_custom_call.1} parent=5 // pred_region
        %s389 = ssub.s32 %s29, 1
        // Predicated region
        $region13: #{tpu_custom_call.1} parent=11 // pred_check
          %p390 = pneg %p69
        $region14: #{tpu_custom_call.1} parent=11 // pred_check_branch
          %392 = sbr.rel (%p390) target = $region16
        $region15: #{tpu_custom_call.1} parent=11 // pred_region
          %s394 = ssub.s32 16, 16
          %395 = vsyncadd [#allocation6], %s394
          %s397 = sshll.u32 %s0, 4
          %s398 = int_to_ptr.vmem [resolvable:$true] %s397
          %400 = dma.vmem_to_smem %s398, 16, [#allocation3], [#allocation6]
        $region16: #{tpu_custom_call.1} parent=11 // pred_fallthru
          _
        // Predicated region
        $region17: #{tpu_custom_call.1} parent=11 // pred_check
          %p401 = pneg %p90
        $region18: #{tpu_custom_call.1} parent=11 // pred_check_branch
          %403 = sbr.rel (%p401) target = $region20
        $region19: #{tpu_custom_call.1} parent=11 // pred_region
          %s405 = ssub.s32 16, 16
          %406 = vsyncadd [#allocation8], %s405
          %s408 = sshll.u32 %s1, 4
          %s409 = int_to_ptr.vmem [resolvable:$true] %s408
          %411 = dma.vmem_to_smem %s409, 16, [#allocation7], [#allocation8]
        $region20: #{tpu_custom_call.1} parent=11 // pred_fallthru
          _
        // Predicated region
        $region21: #{tpu_custom_call.1} parent=11 // pred_check
          %p412 = pneg %p221
        $region22: #{tpu_custom_call.1} parent=11 // pred_check_branch
          %414 = sbr.rel (%p412) target = $region24
        $region23: #{tpu_custom_call.1} parent=11 // pred_region
          %s416 = ssub.s32 1024, 1024
          %417 = vsyncadd [#allocation11], %s416
          %s418 = sshll.u32 [#allocation10], 4
          %s419 = int_to_ptr.vmem [resolvable:$true] %s418
          %424 = dma.hbm_to_vmem [thread:$0]  %s6, 1024, %s419, [#allocation11], 64, 64, 4
        $region24: #{tpu_custom_call.1} parent=11 // pred_fallthru
          _
        // Predicated region
        $region25: #{tpu_custom_call.1} parent=11 // pred_check
          %p425 = pneg %p242
        $region26: #{tpu_custom_call.1} parent=11 // pred_check_branch
          %427 = sbr.rel (%p425) target = $region28
        $region27: #{tpu_custom_call.1} parent=11 // pred_region
          %s429 = ssub.s32 1024, 1024
          %430 = vsyncadd [#allocation11], %s429
          %s431 = sshll.u32 [#allocation12], 4
          %s432 = int_to_ptr.vmem [resolvable:$true] %s431
          %437 = dma.hbm_to_vmem [thread:$0]  %s7, 1024, %s432, [#allocation11], 64, 64, 4
        $region28: #{tpu_custom_call.1} parent=11 // pred_fallthru
          _
        // Predicated region
        $region29: #{tpu_custom_call.1} parent=11 // pred_check
          %p438 = pneg %p263
        $region30: #{tpu_custom_call.1} parent=11 // pred_check_branch
          %440 = sbr.rel (%p438) target = $region32
        $region31: #{tpu_custom_call.1} parent=11 // pred_region
          %s442 = ssub.s32 1024, 1024
          %443 = vsyncadd [#allocation14], %s442
          %s444 = sshll.u32 [#allocation13], 4
          %s445 = int_to_ptr.vmem [resolvable:$true] %s444
          %450 = dma.hbm_to_vmem [thread:$0]  %s8, 1024, %s445, [#allocation14], 64, 64, 4
        $region32: #{tpu_custom_call.1} parent=11 // pred_fallthru
          _
        // Predicated region
        $region33: #{tpu_custom_call.1} parent=11 // pred_check
          %p451 = pneg %p284
        $region34: #{tpu_custom_call.1} parent=11 // pred_check_branch
          %453 = sbr.rel (%p451) target = $region36
        $region35: #{tpu_custom_call.1} parent=11 // pred_region
          _
        $region36: #{tpu_custom_call.1} parent=11 // pred_fallthru
          _
        // Predicated region
        $region37: #{tpu_custom_call.1} parent=11 // pred_check
          %p454 = pneg %p305
        $region38: #{tpu_custom_call.1} parent=11 // pred_check_branch
          %456 = sbr.rel (%p454) target = $region40
        $region39: #{tpu_custom_call.1} parent=11 // pred_region
          _
        $region40: #{tpu_custom_call.1} parent=11 // pred_fallthru
          _
        // Predicated region
        $region41: #{tpu_custom_call.1} parent=11 // pred_check
          %p457 = pneg %p326
        $region42: #{tpu_custom_call.1} parent=11 // pred_check_branch
          %459 = sbr.rel (%p457) target = $region44
        $region43: #{tpu_custom_call.1} parent=11 // pred_region
          %s461 = ssub.s32 1024, 1024
          %462 = vsyncadd [#allocation14], %s461
          %s463 = sshll.u32 [#allocation15], 4
          %s464 = int_to_ptr.vmem [resolvable:$true] %s463
          %469 = dma.hbm_to_vmem [thread:$0]  %s11, 1024, %s464, [#allocation14], 64, 64, 4
        $region44: #{tpu_custom_call.1} parent=11 // pred_fallthru
          _
        // Predicated region
        $region45: #{tpu_custom_call.1} parent=11 // pred_check
          %p470 = pneg %p347
        $region46: #{tpu_custom_call.1} parent=11 // pred_check_branch
          %472 = sbr.rel (%p470) target = $region48
        $region47: #{tpu_custom_call.1} parent=11 // pred_region
          _
        $region48: #{tpu_custom_call.1} parent=11 // pred_fallthru
          _
      $region12: #{tpu_custom_call.1} parent=5 // pred_fallthru
        _
      %p473 = scmp.lt.s32.totalorder %s29, 20
      // Predicated region
      $region49: #{tpu_custom_call.1} parent=5 // pred_check
        %p474 = pneg %p473
      $region50: #{tpu_custom_call.1} parent=5 // pred_check_branch
        %476 = sbr.rel (%p474) target = $region52
      $region51: #{tpu_custom_call.1} parent=5 // pred_region
        // Predicated region
        $region53: #{tpu_custom_call.1} parent=51 // pred_check
          %p477 = pneg %p112
        $region54: #{tpu_custom_call.1} parent=51 // pred_check_branch
          %479 = sbr.rel (%p477) target = $region56
        $region55: #{tpu_custom_call.1} parent=51 // pred_region
          %s480 = smul.u32 2, %s37
          %p481 = scmp.lt.s32.totalorder %s36, 1
          %s482 = scalar_select %p481, %s36, 1
          %p483 = scmp.lt.s32.totalorder %s480, 1
          %s484 = scalar_select %p483, %s480, 1
          %s485 = smul.addr %s482, 2
          %s486 = sadd.s32 %s484, %s485
          %s487 = smul.addr %s486, 8
          %s488 = scalar_lea.vmem %s2, %s487
          %s489 = smul.u32 2, %s37
        $region56: #{tpu_custom_call.1} parent=51 // pred_fallthru
          _
        // Predicated region
        $region57: #{tpu_custom_call.1} parent=51 // pred_check
          %p490 = pneg %p140
        $region58: #{tpu_custom_call.1} parent=51 // pred_check_branch
          %492 = sbr.rel (%p490) target = $region60
        $region59: #{tpu_custom_call.1} parent=51 // pred_region
          %s493 = sand.u32 %s130, 1
          %s494 = scalar_lea.sflag [#allocation4], %s493
          %s495 = sand.u32 %s130, 1
          %s496 = smul.addr %s495, 8
          %s497 = scalar_lea.vmem [#allocation9], %s496
          %s498 = smul.u32 2, %s37
          %s500 = ssub.s32 128, 128
          %501 = vsyncadd %s494, %s500
          %s502 = smul.addr %s36, 2
          %s503 = sadd.s32 %s498, %s502
          %s504 = smul.addr %s503, 64
          %s505 = scalar_lea.hbm %s3, %s504
          %s506 = sshll.u32 %s497, 4
          %s507 = int_to_ptr.vmem [resolvable:$true] %s506
          %512 = dma.hbm_to_vmem [thread:$0]  %s505, 128, %s507, %s494, 64, 64, 4
        $region60: #{tpu_custom_call.1} parent=51 // pred_fallthru
          _
        // Predicated region
        $region61: #{tpu_custom_call.1} parent=51 // pred_check
          %p513 = pneg %p168
        $region62: #{tpu_custom_call.1} parent=51 // pred_check_branch
          %515 = sbr.rel (%p513) target = $region64
        $region63: #{tpu_custom_call.1} parent=51 // pred_region
          %s516 = smul.u32 2, %s37
          %p517 = scmp.lt.s32.totalorder %s36, 1
          %s518 = scalar_select %p517, %s36, 1
          %p519 = scmp.lt.s32.totalorder %s516, 1
          %s520 = scalar_select %p519, %s516, 1
          %s521 = smul.addr %s518, 2
          %s522 = sadd.s32 %s520, %s521
          %s523 = smul.addr %s522, 8
          %s524 = scalar_lea.vmem %s4, %s523
          %s525 = smul.u32 2, %s37
        $region64: #{tpu_custom_call.1} parent=51 // pred_fallthru
          _
        // Predicated region
        $region65: #{tpu_custom_call.1} parent=51 // pred_check
          %p526 = pneg %p194
        $region66: #{tpu_custom_call.1} parent=51 // pred_check_branch
          %528 = sbr.rel (%p526) target = $region68
        $region67: #{tpu_custom_call.1} parent=51 // pred_region
          %p529 = scmp.lt.s32.totalorder %s36, 1
          %s530 = scalar_select %p529, %s36, 1
          %s531 = scalar_lea.vmem %s5, %s530
        $region68: #{tpu_custom_call.1} parent=51 // pred_fallthru
          _
      $region52: #{tpu_custom_call.1} parent=5 // pred_fallthru
        _
      %p532 = scmp.le.s32.totalorder 1, %s29
      %p533 = scmp.lt.s32.totalorder %s29, 21
      %p534 = pnand %p532, %p533
      %p535 = pneg %p534
      // Predicated region
      $region69: #{tpu_custom_call.1} parent=5 // pred_check
        _
      $region70: #{tpu_custom_call.1} parent=5 // pred_check_branch
        %537 = sbr.rel (%p534) target = $region72
      $region71: #{tpu_custom_call.1} parent=5 // pred_region
        %s538 = ssub.s32 %s29, 1
        // Predicated region
        $region73: #{tpu_custom_call.1} parent=71 // pred_check
          %p539 = pneg %p69
        $region74: #{tpu_custom_call.1} parent=71 // pred_check_branch
          %541 = sbr.rel (%p539) target = $region76
        $region75: #{tpu_custom_call.1} parent=71 // pred_region
          %542 = dma.done [#allocation6], 16
        $region76: #{tpu_custom_call.1} parent=71 // pred_fallthru
          _
        // Predicated region
        $region77: #{tpu_custom_call.1} parent=71 // pred_check
          %p543 = pneg %p90
        $region78: #{tpu_custom_call.1} parent=71 // pred_check_branch
          %545 = sbr.rel (%p543) target = $region80
        $region79: #{tpu_custom_call.1} parent=71 // pred_region
          %546 = dma.done [#allocation8], 16
        $region80: #{tpu_custom_call.1} parent=71 // pred_fallthru
          _
        %s547 = sand.u32 %s133, 1
        %s548 = scalar_lea.sflag [#allocation4], %s547
        %s549 = sand.u32 %s133, 1
        %s550 = smul.addr %s549, 8
        %s551 = scalar_lea.vmem [#allocation9], %s550
        // Predicated region
        $region81: #{tpu_custom_call.1} parent=71 // pred_check
          %p552 = pneg %p146
        $region82: #{tpu_custom_call.1} parent=71 // pred_check_branch
          %554 = sbr.rel (%p552) target = $region84
        $region83: #{tpu_custom_call.1} parent=71 // pred_region
          %555 = dma.done %s548, 128
        $region84: #{tpu_custom_call.1} parent=71 // pred_fallthru
          _
        // Predicated region
        $region85: #{tpu_custom_call.1} parent=71 // pred_check
          %p556 = pneg %p221
        $region86: #{tpu_custom_call.1} parent=71 // pred_check_branch
          %558 = sbr.rel (%p556) target = $region88
        $region87: #{tpu_custom_call.1} parent=71 // pred_region
          %559 = dma.done [#allocation11], 1024
        $region88: #{tpu_custom_call.1} parent=71 // pred_fallthru
          _
        // Predicated region
        $region89: #{tpu_custom_call.1} parent=71 // pred_check
          %p560 = pneg %p242
        $region90: #{tpu_custom_call.1} parent=71 // pred_check_branch
          %562 = sbr.rel (%p560) target = $region92
        $region91: #{tpu_custom_call.1} parent=71 // pred_region
          %563 = dma.done [#allocation11], 1024
        $region92: #{tpu_custom_call.1} parent=71 // pred_fallthru
          _
        // Predicated region
        $region93: #{tpu_custom_call.1} parent=71 // pred_check
          %p564 = pneg %p263
        $region94: #{tpu_custom_call.1} parent=71 // pred_check_branch
          %566 = sbr.rel (%p564) target = $region96
        $region95: #{tpu_custom_call.1} parent=71 // pred_region
          %567 = dma.done [#allocation14], 1024
        $region96: #{tpu_custom_call.1} parent=71 // pred_fallthru
          _
        // Predicated region
        $region97: #{tpu_custom_call.1} parent=71 // pred_check
          %p568 = pneg %p326
        $region98: #{tpu_custom_call.1} parent=71 // pred_check_branch
          %570 = sbr.rel (%p568) target = $region100
        $region99: #{tpu_custom_call.1} parent=71 // pred_region
          %571 = dma.done [#allocation14], 1024
        $region100: #{tpu_custom_call.1} parent=71 // pred_fallthru
          _
        %572 = sfence
        %p573 = pneg %p69
        %p574 = pneg %p66
        %p575 = pneg %p90
        %p576 = pneg %p87
        %s577 = smul.u32 2, %s40
        %p578 = scmp.lt.s32.totalorder %s39, 1
        %s579 = scalar_select %p578, %s39, 1
        %p580 = scmp.lt.s32.totalorder %s577, 1
        %s581 = scalar_select %p580, %s577, 1
        %s582 = smul.addr %s579, 2
        %s583 = sadd.s32 %s581, %s582
        %s584 = smul.addr %s583, 8
        %s585 = scalar_lea.vmem %s2, %s584
        %p586 = pneg %p118
        %p587 = pneg %p115
        %s588 = sand.u32 %s133, 1
        %s589 = scalar_lea.sflag [#allocation4], %s588
        %s590 = sand.u32 %s133, 1
        %s591 = smul.addr %s590, 8
        %s592 = scalar_lea.vmem [#allocation9], %s591
        %p593 = pneg %p146
        %p594 = pneg %p143
        %s595 = smul.u32 2, %s40
        %p596 = scmp.lt.s32.totalorder %s39, 1
        %s597 = scalar_select %p596, %s39, 1
        %p598 = scmp.lt.s32.totalorder %s595, 1
        %s599 = scalar_select %p598, %s595, 1
        %s600 = smul.addr %s597, 2
        %s601 = sadd.s32 %s599, %s600
        %s602 = smul.addr %s601, 8
        %s603 = scalar_lea.vmem %s4, %s602
        %p604 = pneg %p174
        %p605 = pneg %p171
        %p606 = scmp.lt.s32.totalorder %s39, 1
        %s607 = scalar_select %p606, %s39, 1
        %s608 = scalar_lea.vmem %s5, %s607
        %p609 = pneg %p200
        %p610 = pneg %p197
        %p611 = pneg %p221
        %p612 = pneg %p218
        %p613 = pneg %p242
        %p614 = pneg %p239
        %p615 = pneg %p263
        %p616 = pneg %p260
        %p617 = pneg %p284
        %p618 = pneg %p281
        %p619 = pneg %p305
        %p620 = pneg %p302
        %p621 = pneg %p326
        %p622 = pneg %p323
        %p623 = pneg %p347
        %p624 = pneg %p344
        %p625 = pneg %p375
        %p626 = pneg %p372
        %s627 = sand.u32 %s362, 1
        %s628 = scalar_lea.sflag [#allocation5], %s627
        %s629 = sand.u32 %s362, 1
        %s630 = smul.addr %s629, 16
        %s631 = scalar_lea.vmem [#allocation16], %s630
        %s632 = smul.u32 2, %s40
        %p633 = scmp.lt.s32.totalorder %s39, 1
        %s634 = scalar_select %p633, %s39, 1
        %p635 = scmp.lt.s32.totalorder %s632, 1
        %s636 = scalar_select %p635, %s632, 1
        %s637 = smul.addr %s634, 2
        %s638 = sadd.s32 %s636, %s637
        %s639 = smul.addr %s638, 8
        %s640 = scalar_lea.vmem %s2, %s639
        %s641 = smul.u32 2, %s40
        %s642 = smul.u32 2, %s40
        %s643 = smul.u32 2, %s40
        %p644 = scmp.lt.s32.totalorder %s39, 1
        %s645 = scalar_select %p644, %s39, 1
        %p646 = scmp.lt.s32.totalorder %s643, 1
        %s647 = scalar_select %p646, %s643, 1
        %s648 = smul.addr %s645, 2
        %s649 = sadd.s32 %s647, %s648
        %s650 = smul.addr %s649, 8
        %s651 = scalar_lea.vmem %s4, %s650
        %s652 = smul.u32 2, %s40
        %p653 = scmp.lt.s32.totalorder %s39, 1
        %s654 = scalar_select %p653, %s39, 1
        %s655 = scalar_lea.vmem %s5, %s654
        %s656 = smul.u32 2, %s40
        %s658 = sld [smem:[#allocation3 + %s41]]
        %s659 = sld [smem:[#allocation7 + %s41]]
        %p660 = scmp.eq.s32.totalorder %s41, 0
        // Predicated region
        $region101: #{tpu_custom_call.1} parent=71 // pred_check
          %p661 = pneg %p660
        $region102: #{tpu_custom_call.1} parent=71 // pred_check_branch
          %663 = sbr.rel (%p661) target = $region104
        $region103: #{tpu_custom_call.1} parent=71 // pred_region
          %v664 = vld [vmem:[%s640] sm:$0xff]
          %v665 = vld [vmem:[%s640 + $0x8] sm:$0xff]
          %666 = vst [vmem:[%s631] sm:$0xff] %v664
          %667 = vst [vmem:[%s631 + $0x8] sm:$0xff] %v665
          %v668 = vld [vmem:[%s551] sm:$0xf]
          %v669 = vld [vmem:[%s551 + $0x4] sm:$0xf]
          %v670 = vld [vmem:[#allocation12] sm:$0xf]
          %v671 = vld [vmem:[#allocation12 + $0x4] sm:$0xf]
          %v672 = vld [vmem:[#allocation12 + $0x8] sm:$0xf]
          %v673 = vld [vmem:[#allocation12 + $0xc] sm:$0xf]
          %v674 = vld [vmem:[#allocation12 + $0x10] sm:$0xf]
          %v675 = vld [vmem:[#allocation12 + $0x14] sm:$0xf]
          %v676 = vld [vmem:[#allocation12 + $0x18] sm:$0xf]
          %v677 = vld [vmem:[#allocation12 + $0x1c] sm:$0xf]
          %v678 = vld [vmem:[#allocation12 + $0x20] sm:$0xf]
          %v679 = vld [vmem:[#allocation12 + $0x24] sm:$0xf]
          %v680 = vld [vmem:[#allocation12 + $0x28] sm:$0xf]
          %v681 = vld [vmem:[#allocation12 + $0x2c] sm:$0xf]
          %v682 = vld [vmem:[#allocation12 + $0x30] sm:$0xf]
          %v683 = vld [vmem:[#allocation12 + $0x34] sm:$0xf]
          %v684 = vld [vmem:[#allocation12 + $0x38] sm:$0xf]
          %v685 = vld [vmem:[#allocation12 + $0x3c] sm:$0xf]
          %v686 = vld [vmem:[%s655] sm:$0x1]
          %v687 = vld [vmem:[#allocation13] sm:$0xf]
          %v688 = vld [vmem:[#allocation13 + $0x4] sm:$0xf]
          %v689 = vld [vmem:[#allocation13 + $0x8] sm:$0xf]
          %v690 = vld [vmem:[#allocation13 + $0xc] sm:$0xf]
          %v691 = vld [vmem:[#allocation13 + $0x10] sm:$0xf]
          %v692 = vld [vmem:[#allocation13 + $0x14] sm:$0xf]
          %v693 = vld [vmem:[#allocation13 + $0x18] sm:$0xf]
          %v694 = vld [vmem:[#allocation13 + $0x1c] sm:$0xf]
          %v695 = vld [vmem:[#allocation13 + $0x20] sm:$0xf]
          %v696 = vld [vmem:[#allocation13 + $0x24] sm:$0xf]
          %v697 = vld [vmem:[#allocation13 + $0x28] sm:$0xf]
          %v698 = vld [vmem:[#allocation13 + $0x2c] sm:$0xf]
          %v699 = vld [vmem:[#allocation13 + $0x30] sm:$0xf]
          %v700 = vld [vmem:[#allocation13 + $0x34] sm:$0xf]
          %v701 = vld [vmem:[#allocation13 + $0x38] sm:$0xf]
          %v702 = vld [vmem:[#allocation13 + $0x3c] sm:$0xf]
          %v719 = vunpack.c.l.b16 %v687
          %v720 = vunpack.c.l.b16 %v688
          %v721 = vunpack.c.l.b16 %v689
          %v722 = vunpack.c.l.b16 %v690
          %v723 = vunpack.c.l.b16 %v691
          %v724 = vunpack.c.l.b16 %v692
          %v725 = vunpack.c.l.b16 %v693
          %v726 = vunpack.c.l.b16 %v694
          %v727 = vunpack.c.l.b16 %v695
          %v728 = vunpack.c.l.b16 %v696
          %v729 = vunpack.c.l.b16 %v697
          %v730 = vunpack.c.l.b16 %v698
          %v731 = vunpack.c.l.b16 %v699
          %v732 = vunpack.c.l.b16 %v700
          %v733 = vunpack.c.l.b16 %v701
          %v734 = vunpack.c.l.b16 %v702
          %v735 = vpack.c.b16 %v720, %v719
          %v736 = vpack.c.b16 %v722, %v721
          %v737 = vpack.c.b16 %v724, %v723
          %v738 = vpack.c.b16 %v726, %v725
          %v739 = vpack.c.b16 %v728, %v727
          %v740 = vpack.c.b16 %v730, %v729
          %v741 = vpack.c.b16 %v732, %v731
          %v742 = vpack.c.b16 %v734, %v733
          %751 = vmatprep.subr.bf16.mxu0 0
          %752 = vmatpush1.bf16.msra.mxu0 %v742
          %753 = vmatprep.subr.bf16.mxu0 0
          %754 = vmatpush1.bf16.msra.mxu0 %v741
          %755 = vmatprep.subr.bf16.mxu0 0
          %756 = vmatpush1.bf16.msra.mxu0 %v740
          %757 = vmatprep.subr.bf16.mxu0 0
          %758 = vmatpush1.bf16.msra.mxu0 %v739
          %759 = vmatprep.subr.bf16.mxu0 0
          %760 = vmatpush1.bf16.msra.mxu0 %v738
          %761 = vmatprep.subr.bf16.mxu0 0
          %762 = vmatpush1.bf16.msra.mxu0 %v737
          %763 = vmatprep.subr.bf16.mxu0 0
          %764 = vmatpush1.bf16.msra.mxu0 %v736
          %765 = vmatprep.subr.bf16.mxu0 0
          %766 = vmatpush1.bf16.msra.mxu0 %v735
          %767 = vmatprep.subr.bf16.mxu0 0
          %768 = vmatpush2.bf16.msra.mxu0 0
          %769 = vmatprep.subr.bf16.mxu0 0
          %770 = vmatpush2.bf16.msra.mxu0 0
          %771 = vmatprep.subr.bf16.mxu0 0
          %772 = vmatpush2.bf16.msra.mxu0 0
          %773 = vmatprep.subr.bf16.mxu0 0
          %774 = vmatpush2.bf16.msra.mxu0 0
          %775 = vmatprep.subr.bf16.mxu0 0
          %776 = vmatpush2.bf16.msra.mxu0 0
          %777 = vmatprep.subr.bf16.mxu0 0
          %778 = vmatpush2.bf16.msra.mxu0 0
          %779 = vmatprep.subr.bf16.mxu0 0
          %780 = vmatpush2.bf16.msra.mxu0 0
          %781 = vmatprep.subr.bf16.mxu0 0
          %782 = vmatpush2.bf16.msra.mxu0 0
          %783 = vmatprep.mubr.bf16.mxu0 0
          %784 = vmatmul.mubr.bf16.gmra.mxu0 %v686
          %v785 = vpop.f32.mrf.mxu0
          %v786 = vadd.f32 0.0, %v785
          %v787 = vpop.f32.mrf.mxu0
          %v788 = vpop.f32.mrf.mxu0
          %v789 = vpop.f32.mrf.mxu0
          %790 = vdwg.mxu0
          %v791 = vlaneseq
          %v792 = vshrl.u32 %v791, 7
          %v793 = vsub.s32 0, %v792
          %v794 = vrot.slane %v786, %v793
          %v797 = vunpack.c.l.b16 %v668
          %v798 = vunpack.c.l.b16 %v669
          %v799 = vpack.c.b16 %v798, %v797
          %v817 = vunpack.c.l.b16 %v670
          %v818 = vunpack.c.l.b16 %v671
          %v819 = vunpack.c.l.b16 %v672
          %v820 = vunpack.c.l.b16 %v673
          %v821 = vunpack.c.l.b16 %v674
          %v822 = vunpack.c.l.b16 %v675
          %v823 = vunpack.c.l.b16 %v676
          %v824 = vunpack.c.l.b16 %v677
          %v825 = vunpack.c.l.b16 %v678
          %v826 = vunpack.c.l.b16 %v679
          %v827 = vunpack.c.l.b16 %v680
          %v828 = vunpack.c.l.b16 %v681
          %v829 = vunpack.c.l.b16 %v682
          %v830 = vunpack.c.l.b16 %v683
          %v831 = vunpack.c.l.b16 %v684
          %v832 = vunpack.c.l.b16 %v685
          %v833 = vpack.c.b16 %v818, %v817
          %v834 = vpack.c.b16 %v820, %v819
          %v835 = vpack.c.b16 %v822, %v821
          %v836 = vpack.c.b16 %v824, %v823
          %v837 = vpack.c.b16 %v826, %v825
          %v838 = vpack.c.b16 %v828, %v827
          %v839 = vpack.c.b16 %v830, %v829
          %v840 = vpack.c.b16 %v832, %v831
          %849 = vmatprep.subr.bf16.mxu0 0
          %850 = vmatpush1.bf16.msra.mxu0 %v840
          %851 = vmatprep.subr.bf16.mxu0 0
          %852 = vmatpush1.bf16.msra.mxu0 %v839
          %853 = vmatprep.subr.bf16.mxu0 0
          %854 = vmatpush1.bf16.msra.mxu0 %v838
          %855 = vmatprep.subr.bf16.mxu0 0
          %856 = vmatpush1.bf16.msra.mxu0 %v837
          %857 = vmatprep.subr.bf16.mxu0 0
          %858 = vmatpush1.bf16.msra.mxu0 %v836
          %859 = vmatprep.subr.bf16.mxu0 0
          %860 = vmatpush1.bf16.msra.mxu0 %v835
          %861 = vmatprep.subr.bf16.mxu0 0
          %862 = vmatpush1.bf16.msra.mxu0 %v834
          %863 = vmatprep.subr.bf16.mxu0 0
          %864 = vmatpush1.bf16.msra.mxu0 %v833
          %865 = vmatprep.subr.bf16.mxu0 0
          %866 = vmatpush2.bf16.msra.mxu0 0
          %867 = vmatprep.subr.bf16.mxu0 0
          %868 = vmatpush2.bf16.msra.mxu0 0
          %869 = vmatprep.subr.bf16.mxu0 0
          %870 = vmatpush2.bf16.msra.mxu0 0
          %871 = vmatprep.subr.bf16.mxu0 0
          %872 = vmatpush2.bf16.msra.mxu0 0
          %873 = vmatprep.subr.bf16.mxu0 0
          %874 = vmatpush2.bf16.msra.mxu0 0
          %875 = vmatprep.subr.bf16.mxu0 0
          %876 = vmatpush2.bf16.msra.mxu0 0
          %877 = vmatprep.subr.bf16.mxu0 0
          %878 = vmatpush2.bf16.msra.mxu0 0
          %879 = vmatprep.subr.bf16.mxu0 0
          %880 = vmatpush2.bf16.msra.mxu0 0
          %881 = vmatprep.mubr.bf16.mxu0 0
          %882 = vmatmul.mubr.bf16.gmra.mxu0 %v799
          %v883 = vpop.f32.mrf.mxu0
          %v884 = vadd.f32 %v794, %v883
          %v885 = vpop.f32.mrf.mxu0
          %v886 = vpop.f32.mrf.mxu0
          %v887 = vadd.f32 %v794, %v886
          %v888 = vpop.f32.mrf.mxu0
          %889 = vdwg.mxu0
          %890 = vst [vmem:[#allocation2] sm:$0xff] %v884
          %891 = vst [vmem:[#allocation2 + $0x8] sm:$0xff] %v887
        $region104: #{tpu_custom_call.1} parent=71 // pred_fallthru
          _
        %v892 = vld [vmem:[%s631] sm:$0xff]
        %v893 = vld [vmem:[%s631 + $0x8] sm:$0xff]
        %v894 = vpack.c.bf16 %v893, %v892
        %v895 = vld [vmem:[#allocation10] sm:$0xf]
        %v896 = vld [vmem:[#allocation10 + $0x4] sm:$0xf]
        %v897 = vld [vmem:[#allocation10 + $0x8] sm:$0xf]
        %v898 = vld [vmem:[#allocation10 + $0xc] sm:$0xf]
        %v899 = vld [vmem:[#allocation10 + $0x10] sm:$0xf]
        %v900 = vld [vmem:[#allocation10 + $0x14] sm:$0xf]
        %v901 = vld [vmem:[#allocation10 + $0x18] sm:$0xf]
        %v902 = vld [vmem:[#allocation10 + $0x1c] sm:$0xf]
        %v903 = vld [vmem:[#allocation10 + $0x20] sm:$0xf]
        %v904 = vld [vmem:[#allocation10 + $0x24] sm:$0xf]
        %v905 = vld [vmem:[#allocation10 + $0x28] sm:$0xf]
        %v906 = vld [vmem:[#allocation10 + $0x2c] sm:$0xf]
        %v907 = vld [vmem:[#allocation10 + $0x30] sm:$0xf]
        %v908 = vld [vmem:[#allocation10 + $0x34] sm:$0xf]
        %v909 = vld [vmem:[#allocation10 + $0x38] sm:$0xf]
        %v910 = vld [vmem:[#allocation10 + $0x3c] sm:$0xf]
        %v927 = vunpack.c.l.b16 %v895
        %v928 = vunpack.c.l.b16 %v896
        %v929 = vunpack.c.l.b16 %v897
        %v930 = vunpack.c.l.b16 %v898
        %v931 = vunpack.c.l.b16 %v899
        %v932 = vunpack.c.l.b16 %v900
        %v933 = vunpack.c.l.b16 %v901
        %v934 = vunpack.c.l.b16 %v902
        %v935 = vunpack.c.l.b16 %v903
        %v936 = vunpack.c.l.b16 %v904
        %v937 = vunpack.c.l.b16 %v905
        %v938 = vunpack.c.l.b16 %v906
        %v939 = vunpack.c.l.b16 %v907
        %v940 = vunpack.c.l.b16 %v908
        %v941 = vunpack.c.l.b16 %v909
        %v942 = vunpack.c.l.b16 %v910
        %v943 = vpack.c.b16 %v928, %v927
        %v944 = vpack.c.b16 %v930, %v929
        %v945 = vpack.c.b16 %v932, %v931
        %v946 = vpack.c.b16 %v934, %v933
        %v947 = vpack.c.b16 %v936, %v935
        %v948 = vpack.c.b16 %v938, %v937
        %v949 = vpack.c.b16 %v940, %v939
        %v950 = vpack.c.b16 %v942, %v941
        %959 = vmatprep.subr.bf16.mxu0 0
        %960 = vmatpush1.bf16.msra.mxu0 %v950
        %961 = vmatprep.subr.bf16.mxu0 0
        %962 = vmatpush1.bf16.msra.mxu0 %v949
        %963 = vmatprep.subr.bf16.mxu0 0
        %964 = vmatpush1.bf16.msra.mxu0 %v948
        %965 = vmatprep.subr.bf16.mxu0 0
        %966 = vmatpush1.bf16.msra.mxu0 %v947
        %967 = vmatprep.subr.bf16.mxu0 0
        %968 = vmatpush1.bf16.msra.mxu0 %v946
        %969 = vmatprep.subr.bf16.mxu0 0
        %970 = vmatpush1.bf16.msra.mxu0 %v945
        %971 = vmatprep.subr.bf16.mxu0 0
        %972 = vmatpush1.bf16.msra.mxu0 %v944
        %973 = vmatprep.subr.bf16.mxu0 0
        %974 = vmatpush1.bf16.msra.mxu0 %v943
        %975 = vmatprep.subr.bf16.mxu0 0
        %976 = vmatpush2.bf16.msra.mxu0 0
        %977 = vmatprep.subr.bf16.mxu0 0
        %978 = vmatpush2.bf16.msra.mxu0 0
        %979 = vmatprep.subr.bf16.mxu0 0
        %980 = vmatpush2.bf16.msra.mxu0 0
        %981 = vmatprep.subr.bf16.mxu0 0
        %982 = vmatpush2.bf16.msra.mxu0 0
        %983 = vmatprep.subr.bf16.mxu0 0
        %984 = vmatpush2.bf16.msra.mxu0 0
        %985 = vmatprep.subr.bf16.mxu0 0
        %986 = vmatpush2.bf16.msra.mxu0 0
        %987 = vmatprep.subr.bf16.mxu0 0
        %988 = vmatpush2.bf16.msra.mxu0 0
        %989 = vmatprep.subr.bf16.mxu0 0
        %990 = vmatpush2.bf16.msra.mxu0 0
        %991 = vmatprep.mubr.bf16.mxu0 0
        %992 = vmatmul.mubr.bf16.gmra.mxu0 %v894
        %v993 = vpop.f32.mrf.mxu0
        %v994 = vadd.f32 0.0, %v993
        %v995 = vpop.f32.mrf.mxu0
        %v996 = vpop.f32.mrf.mxu0
        %v997 = vadd.f32 0.0, %v996
        %v998 = vpop.f32.mrf.mxu0
        %999 = vdwg.mxu0
        %v1000 = vld [vmem:[%s9] sm:$0x1]
        %v1001 = vstv %s658
        %v1002 = vmul.f32 %v1001, %v1000
        %v1003 = vld [vmem:[%s10] sm:$0x1]
        %v1004 = vadd.f32 %v1002, %v1003
        %v1005 = vld [vmem:[#allocation2] sm:$0xff]
        %v1006 = vld [vmem:[#allocation2 + $0x8] sm:$0xff]
        %v1007 = vadd.f32 %v994, %v1005
        %v1008 = vadd.f32 %v997, %v1006
        %v1010 = vlaneseq
        %v1011 = vshrl.u32 %v1010, 7
        %v1012 = vsub.s32 0, %v1011
        %v1013 = vrot.slane %v1004, %v1012
        %v1015 = vadd.f32 %v1007, %v1013
        %v1016 = vadd.f32 %v1008, %v1013
        %v1017 = vtanh.pop %v1015
        %v1018 = vtanh.pop %v1016
        %v1019 = vadd.f32 %v994, %v1013
        %v1020 = vadd.f32 %v997, %v1013
        %v1021 = vtanh.pop %v1019
        %v1022 = vtanh.pop %v1020
        %v1023 = vmul.f32 %v1017, 1.7
        %v1024 = vmul.f32 %v1018, 1.7
        %v1025 = vmul.f32 %v1021, 0.7
        %v1026 = vmul.f32 %v1022, 0.7
        %v1027 = vsub.f32 %v1023, %v1025
        %v1028 = vsub.f32 %v1024, %v1026
        %v1029 = vpack.c.bf16 %v1028, %v1027
        %v1030 = vld [vmem:[#allocation15] sm:$0xf]
        %v1031 = vld [vmem:[#allocation15 + $0x4] sm:$0xf]
        %v1032 = vld [vmem:[#allocation15 + $0x8] sm:$0xf]
        %v1033 = vld [vmem:[#allocation15 + $0xc] sm:$0xf]
        %v1034 = vld [vmem:[#allocation15 + $0x10] sm:$0xf]
        %v1035 = vld [vmem:[#allocation15 + $0x14] sm:$0xf]
        %v1036 = vld [vmem:[#allocation15 + $0x18] sm:$0xf]
        %v1037 = vld [vmem:[#allocation15 + $0x1c] sm:$0xf]
        %v1038 = vld [vmem:[#allocation15 + $0x20] sm:$0xf]
        %v1039 = vld [vmem:[#allocation15 + $0x24] sm:$0xf]
        %v1040 = vld [vmem:[#allocation15 + $0x28] sm:$0xf]
        %v1041 = vld [vmem:[#allocation15 + $0x2c] sm:$0xf]
        %v1042 = vld [vmem:[#allocation15 + $0x30] sm:$0xf]
        %v1043 = vld [vmem:[#allocation15 + $0x34] sm:$0xf]
        %v1044 = vld [vmem:[#allocation15 + $0x38] sm:$0xf]
        %v1045 = vld [vmem:[#allocation15 + $0x3c] sm:$0xf]
        %v1046 = vld [vmem:[%s12] sm:$0x1]
        %v1048 = vlaneseq
        %v1049 = vshrl.u32 %v1048, 7
        %v1050 = vsub.s32 0, %v1049
        %v1051 = vrot.slane %v1046, %v1050
        %v1069 = vunpack.c.l.b16 %v1030
        %v1070 = vunpack.c.l.b16 %v1031
        %v1071 = vunpack.c.l.b16 %v1032
        %v1072 = vunpack.c.l.b16 %v1033
        %v1073 = vunpack.c.l.b16 %v1034
        %v1074 = vunpack.c.l.b16 %v1035
        %v1075 = vunpack.c.l.b16 %v1036
        %v1076 = vunpack.c.l.b16 %v1037
        %v1077 = vunpack.c.l.b16 %v1038
        %v1078 = vunpack.c.l.b16 %v1039
        %v1079 = vunpack.c.l.b16 %v1040
        %v1080 = vunpack.c.l.b16 %v1041
        %v1081 = vunpack.c.l.b16 %v1042
        %v1082 = vunpack.c.l.b16 %v1043
        %v1083 = vunpack.c.l.b16 %v1044
        %v1084 = vunpack.c.l.b16 %v1045
        %v1085 = vpack.c.b16 %v1070, %v1069
        %v1086 = vpack.c.b16 %v1072, %v1071
        %v1087 = vpack.c.b16 %v1074, %v1073
        %v1088 = vpack.c.b16 %v1076, %v1075
        %v1089 = vpack.c.b16 %v1078, %v1077
        %v1090 = vpack.c.b16 %v1080, %v1079
        %v1091 = vpack.c.b16 %v1082, %v1081
        %v1092 = vpack.c.b16 %v1084, %v1083
        %1101 = vmatprep.subr.bf16.mxu0 0
        %1102 = vmatpush1.bf16.msra.mxu0 %v1092
        %1103 = vmatprep.subr.bf16.mxu0 0
        %1104 = vmatpush1.bf16.msra.mxu0 %v1091
        %1105 = vmatprep.subr.bf16.mxu0 0
        %1106 = vmatpush1.bf16.msra.mxu0 %v1090
        %1107 = vmatprep.subr.bf16.mxu0 0
        %1108 = vmatpush1.bf16.msra.mxu0 %v1089
        %1109 = vmatprep.subr.bf16.mxu0 0
        %1110 = vmatpush1.bf16.msra.mxu0 %v1088
        %1111 = vmatprep.subr.bf16.mxu0 0
        %1112 = vmatpush1.bf16.msra.mxu0 %v1087
        %1113 = vmatprep.subr.bf16.mxu0 0
        %1114 = vmatpush1.bf16.msra.mxu0 %v1086
        %1115 = vmatprep.subr.bf16.mxu0 0
        %1116 = vmatpush1.bf16.msra.mxu0 %v1085
        %1117 = vmatprep.subr.bf16.mxu0 0
        %1118 = vmatpush2.bf16.msra.mxu0 0
        %1119 = vmatprep.subr.bf16.mxu0 0
        %1120 = vmatpush2.bf16.msra.mxu0 0
        %1121 = vmatprep.subr.bf16.mxu0 0
        %1122 = vmatpush2.bf16.msra.mxu0 0
        %1123 = vmatprep.subr.bf16.mxu0 0
        %1124 = vmatpush2.bf16.msra.mxu0 0
        %1125 = vmatprep.subr.bf16.mxu0 0
        %1126 = vmatpush2.bf16.msra.mxu0 0
        %1127 = vmatprep.subr.bf16.mxu0 0
        %1128 = vmatpush2.bf16.msra.mxu0 0
        %1129 = vmatprep.subr.bf16.mxu0 0
        %1130 = vmatpush2.bf16.msra.mxu0 0
        %1131 = vmatprep.subr.bf16.mxu0 0
        %1132 = vmatpush2.bf16.msra.mxu0 0
        %1133 = vmatprep.mubr.bf16.mxu0 0
        %1134 = vmatmul.mubr.bf16.gmra.mxu0 %v1029
        %v1135 = vpop.f32.mrf.mxu0
        %v1136 = vadd.f32 %v1051, %v1135
        %v1137 = vpop.f32.mrf.mxu0
        %v1138 = vpop.f32.mrf.mxu0
        %v1139 = vadd.f32 %v1051, %v1138
        %v1140 = vpop.f32.mrf.mxu0
        %1141 = vdwg.mxu0
        %v1142 = vstv %s659
        %v1143 = vmul.f32 %v1142, %v1136
        %v1144 = vmul.f32 %v1142, %v1139
        %v1145 = vadd.f32 %v892, %v1143
        %v1146 = vadd.f32 %v893, %v1144
        %1147 = vst [vmem:[%s631] sm:$0xff] %v1145
        %1148 = vst [vmem:[%s631 + $0x8] sm:$0xff] %v1146
        %p1149 = scmp.eq.s32.totalorder %s41, 9
        // Predicated region
        $region105: #{tpu_custom_call.1} parent=71 // pred_check
          %p1150 = pneg %p1149
        $region106: #{tpu_custom_call.1} parent=71 // pred_check_branch
          %1152 = sbr.rel (%p1150) target = $region108
        $region107: #{tpu_custom_call.1} parent=71 // pred_region
          %v1153 = vld [vmem:[%s651] sm:$0xff]
          %v1154 = vld [vmem:[%s651 + $0x8] sm:$0xff]
          %1156 = vset.pattern.permute.xlu0 0
          %1157 = vperm.xlu0 %1156, %v1153
          %v1158 = vpop.permute.xlu0 %1157
          %1161 = vset.pattern.permute.xlu0 0
          %1162 = vperm.xlu0 %1161, %v1154
          %v1163 = vpop.permute.xlu0 %1162
          %v1165 = vmul.f32 %v1158, %v1145
          %v1166 = vmul.f32 %v1163, %v1146
          %v1167 = vsub.f32 1.0, %v1153
          %v1168 = vsub.f32 1.0, %v1154
          %v1169 = vld [vmem:[%s640] sm:$0xff]
          %v1170 = vld [vmem:[%s640 + $0x8] sm:$0xff]
          %1172 = vset.pattern.permute.xlu0 0
          %1173 = vperm.xlu0 %1172, %v1167
          %v1174 = vpop.permute.xlu0 %1173
          %1177 = vset.pattern.permute.xlu0 0
          %1178 = vperm.xlu0 %1177, %v1168
          %v1179 = vpop.permute.xlu0 %1178
          %v1181 = vmul.f32 %v1174, %v1169
          %v1182 = vmul.f32 %v1179, %v1170
          %v1183 = vadd.f32 %v1165, %v1181
          %v1184 = vadd.f32 %v1166, %v1182
          %1185 = vst [vmem:[%s631] sm:$0xff] %v1183
          %1186 = vst [vmem:[%s631 + $0x8] sm:$0xff] %v1184
        $region108: #{tpu_custom_call.1} parent=71 // pred_fallthru
          _
        %s1187 = sand.u32 %s362, 1
        %s1188 = scalar_lea.sflag [#allocation5], %s1187
        %s1189 = sand.u32 %s362, 1
        %s1190 = smul.addr %s1189, 16
        %s1191 = scalar_lea.vmem [#allocation16], %s1190
        // Predicated region
        $region109: #{tpu_custom_call.1} parent=71 // pred_check
          %p1192 = pneg %p372
        $region110: #{tpu_custom_call.1} parent=71 // pred_check_branch
          %1194 = sbr.rel (%p1192) target = $region112
        $region111: #{tpu_custom_call.1} parent=71 // pred_region
          %s1195 = smul.u32 2, %s40
          %s1197 = ssub.s32 256, 256
          %1198 = vsyncadd %s1188, %s1197
          %s1199 = smul.addr %s39, 2
          %s1200 = sadd.s32 %s1195, %s1199
          %s1201 = smul.addr %s1200, 128
          %s1202 = scalar_lea.hbm %s13, %s1201
          %s1203 = sshll.u32 %s1191, 4
          %s1204 = int_to_ptr.vmem [resolvable:$true] %s1203
          %1209 = dma.vmem_to_hbm [thread:$0]  %s1204, 256, %s1202, %s1188, 128, 128, 8
        $region112: #{tpu_custom_call.1} parent=71 // pred_fallthru
          _
      $region72: #{tpu_custom_call.1} parent=5 // pred_fallthru
        _
      %p1210 = scmp.le.s32.totalorder 2, %s29
      // Predicated region
      $region113: #{tpu_custom_call.1} parent=5 // pred_check
        %p1211 = pneg %p1210
      $region114: #{tpu_custom_call.1} parent=5 // pred_check_branch
        %1213 = sbr.rel (%p1211) target = $region116
      $region115: #{tpu_custom_call.1} parent=5 // pred_region
        %s1214 = ssub.s32 %s29, 2
        // Predicated region
        $region117: #{tpu_custom_call.1} parent=115 // pred_check
          %p1215 = pneg %p378
        $region118: #{tpu_custom_call.1} parent=115 // pred_check_branch
          %1217 = sbr.rel (%p1215) target = $region120
        $region119: #{tpu_custom_call.1} parent=115 // pred_region
          %s1218 = sand.u32 %s363, 1
          %s1219 = scalar_lea.sflag [#allocation5], %s1218
          %s1220 = sand.u32 %s363, 1
          %s1221 = smul.addr %s1220, 16
          %s1222 = scalar_lea.vmem [#allocation16], %s1221
          %1223 = dma.done %s1219, 256
        $region120: #{tpu_custom_call.1} parent=115 // pred_fallthru
          _
      $region116: #{tpu_custom_call.1} parent=5 // pred_fallthru
        _
    $region6: #{tpu_custom_call.1} parent=1 // loop_footer
      %s33 = sadd.s32 1, %s29
    $region7: #{tpu_custom_call.1} parent=1 // loop_footer_branch
      %28 = sbr.rel target = $region3
    $region8: #{tpu_custom_call.1} parent=1 // loop_exit
      _
    %1224 = vsyncpa [#allocation4], 1
    %s1225 = scalar_lea.sflag [#allocation4], 1
    %1226 = vsyncpa %s1225, 1
    %1227 = vsyncpa [#allocation11], 1
    %1228 = vsyncpa [#allocation14], 1
    %1229 = vsyncpa [#allocation5], 1
    %s1230 = scalar_lea.sflag [#allocation5], 1
    %1231 = vsyncpa %s1230, 1
    %1232 = vsyncpa [#allocation6], 1
    %s1233 = scalar_lea.sflag [#allocation6], 1
    %1234 = vsyncpa %s1233, 1
    %1235 = vsyncpa [#allocation8], 1

</llo_original>
